<compile_context>
chip_gen: v7x
topology: tpu7x:2x2x1
jax: 0.10.0
libtpu: 0.0.40
codegen_flags: <defaults>
</compile_context>

<pallas_src>
import jax
import jax.numpy as jnp
from jax.experimental import pallas as pl
from jax.experimental.pallas import tpu as pltpu

D_IN = 784          # input features
LANE = 128          # padded lane width for all hidden/output feature dims


def mlp_kernel(x_ref, w1_ref, b1_ref, w2_ref, b2_ref, w3_ref, b3_ref, o_ref):
    # x_ref: (TB, 784) f32 (cast to bf16 in-kernel)   w*: bf16 lane-padded
    # b*: (1, 128) f32   o_ref: (TB, 128) f32
    x = x_ref[...].astype(jnp.bfloat16)
    # Linear(784 -> 100[pad 128]) + ReLU   (f32 accumulation on the MXU)
    h1 = jnp.dot(x, w1_ref[...], preferred_element_type=jnp.float32)
    h1 = jnp.maximum(h1 + b1_ref[...], 0.0)
    # Linear(100 -> 50[pad 128]) + ReLU
    h2 = jnp.dot(h1.astype(jnp.bfloat16), w2_ref[...],
                 preferred_element_type=jnp.float32)
    h2 = jnp.maximum(h2 + b2_ref[...], 0.0)
    # Dropout(p=0.5): identity at inference time.
    # TODO(synk): training-mode dropout (mask + 1/(1-p) scaling) not reproduced.
    # Linear(50 -> 10[pad 128])
    o_ref[...] = jnp.dot(h2.astype(jnp.bfloat16), w3_ref[...],
                         preferred_element_type=jnp.float32) + b3_ref[...]


def prepare_params(w1, b1, w2, b2, w3, b3):
    """Zero-pad feature dims to 128 lanes, cast matmul weights to bf16 (once)."""
    def pad_w(w, in_pad, out_pad):
        wp = jnp.zeros((in_pad, out_pad), jnp.float32)
        wp = wp.at[: w.shape[0], : w.shape[1]].set(w)
        return wp.astype(jnp.bfloat16)

    def pad_b(b, out_pad):
        b = jnp.asarray(b, jnp.float32).reshape(1, -1)
        bp = jnp.zeros((1, out_pad), jnp.float32)
        return bp.at[:, : b.shape[1]].set(b)

    return (pad_w(w1, D_IN, LANE), pad_b(b1, LANE),
            pad_w(w2, LANE, LANE), pad_b(b2, LANE),
            pad_w(w3, LANE, LANE), pad_b(b3, LANE))


def _pick_tb(B):
    """Batch tile: 512 rows for large B; for small B, >=2 balanced grid steps
    (v7x megacore) with an 8-sublane-aligned tile."""
    if B > 512:
        return 512
    half = (B + 1) // 2
    return max(8, ((half + 7) // 8) * 8)


def mlp_forward(x, params, *, tb=None):
    """x: (B, 784) f32.  params: output of prepare_params.  Returns (B, 10) f32."""
    w1p, b1p, w2p, b2p, w3p, b3p = params
    B, D = x.shape
    assert D == D_IN

    if tb is None:
        tb = _pick_tb(B)
    nb = pl.cdiv(B, tb)  # ragged last block handled by Pallas (masked store)

    # Weights/biases stay VMEM-resident across all grid steps (constant index_map).
    # NOTE: they still get (needlessly) double-buffered; ~0.5 MiB, irrelevant here.
    resident = lambda shape: pl.BlockSpec(shape, lambda i: (0, 0))

    out_pad = pl.pallas_call(
        mlp_kernel,
        out_shape=jax.ShapeDtypeStruct((B, LANE), jnp.float32),
        grid=(nb,),
        in_specs=[
            pl.BlockSpec((tb, D_IN), lambda i: (i, 0)),   # x: blocked along batch (f32)
            resident((D_IN, LANE)), resident((1, LANE)),  # w1, b1
            resident((LANE, LANE)), resident((1, LANE)),  # w2, b2
            resident((LANE, LANE)), resident((1, LANE)),  # w3, b3
        ],
        out_specs=pl.BlockSpec((tb, LANE), lambda i: (i, 0)),
        compiler_params=pltpu.CompilerParams(
            dimension_semantics=("parallel",)),           # shards batch across v7x TCs
    )(x, w1p, b1p, w2p, b2p, w3p, b3p)

    return out_pad[:, :10]


def init_linear(key, fan_in, fan_out):
    # Deterministic init mimicking PyTorch Linear default (uniform +/- 1/sqrt(fan_in)).
    kw, kb = jax.random.split(key)
    bound = 1.0 / (fan_in ** 0.5)
    w = jax.random.uniform(kw, (fan_in, fan_out), jnp.float32, -bound, bound)
    b = jax.random.uniform(kb, (1, fan_out), jnp.float32, -bound, bound)
    return w, b


def reference_forward(x, w1, b1, w2, b2, w3, b3):
    """Plain-JAX reference mirroring the kernel's bf16 operand rounding."""
    f32 = lambda a: a.astype(jnp.bfloat16).astype(jnp.float32)
    h1 = jnp.maximum(f32(x) @ f32(w1) + b1, 0.0)
    h2 = jnp.maximum(f32(h1) @ f32(w2) + b2, 0.0)
    return f32(h2) @ f32(w3) + b3


if __name__ == "__main__":
    key = jax.random.PRNGKey(0)
    k_x, k1, k2, k3 = jax.random.split(key, 4)

    B = 200  # not a multiple of the batch tile -> exercises the ragged last block
    x = jax.random.normal(k_x, (B, D_IN), jnp.float32)

    w1, b1 = init_linear(k1, D_IN, 100)
    w2, b2 = init_linear(k2, 100, 50)
    w3, b3 = init_linear(k3, 50, 10)

    params = prepare_params(w1, b1, w2, b2, w3, b3)  # padded/bf16, prepared once

    out = mlp_forward(x, params)
    jax.block_until_ready(out)

    ref = reference_forward(x, w1, b1, w2, b2, w3, b3)
    assert out.shape == (B, 10)
    assert jnp.allclose(out, ref, atol=2e-2, rtol=2e-2), float(
        jnp.max(jnp.abs(out - ref)))

    print("KERNEL_OK")
</pallas_src>

<mosaic_0001>
module attributes {stable_mosaic.version = 11 : i64} {
  func.func @mlp_kernel(%arg0: i32, %arg1: memref<104x784xf32, #tpu.memory_space<vmem>>, %arg2: memref<784x128xbf16, #tpu.memory_space<vmem>>, %arg3: memref<1x128xf32, #tpu.memory_space<vmem>>, %arg4: memref<128x128xbf16, #tpu.memory_space<vmem>>, %arg5: memref<1x128xf32, #tpu.memory_space<vmem>>, %arg6: memref<128x128xbf16, #tpu.memory_space<vmem>>, %arg7: memref<1x128xf32, #tpu.memory_space<vmem>>, %arg8: memref<104x128xf32, #tpu.memory_space<vmem>>) attributes {dimension_semantics = [#tpu.dimension_semantics<parallel>], iteration_bounds = array<i64: 2>, scalar_prefetch = 0 : i64, scratch_operands = 0 : i64, tpu.core_type = #tpu.core_type<tc>, window_params = [{transform_indices = @transform_0, window_bounds = array<i64: 104, 784>}, {pipeline_mode = #tpu.pipeline_mode<synchronous>, transform_indices = @transform_1, window_bounds = array<i64: 784, 128>}, {pipeline_mode = #tpu.pipeline_mode<synchronous>, transform_indices = @transform_2, window_bounds = array<i64: 1, 128>}, {pipeline_mode = #tpu.pipeline_mode<synchronous>, transform_indices = @transform_3, window_bounds = array<i64: 128, 128>}, {pipeline_mode = #tpu.pipeline_mode<synchronous>, transform_indices = @transform_4, window_bounds = array<i64: 1, 128>}, {pipeline_mode = #tpu.pipeline_mode<synchronous>, transform_indices = @transform_5, window_bounds = array<i64: 128, 128>}, {pipeline_mode = #tpu.pipeline_mode<synchronous>, transform_indices = @transform_6, window_bounds = array<i64: 1, 128>}, {transform_indices = @transform_7, window_bounds = array<i64: 104, 128>}]} {
    %c0 = arith.constant 0 : index
    %c0_0 = arith.constant 0 : index
    %0 = vector.load %arg1[%c0, %c0_0] : memref<104x784xf32, #tpu.memory_space<vmem>>, vector<104x784xf32>
    %1 = arith.truncf %0 : vector<104x784xf32> to vector<104x784xbf16>
    %c0_1 = arith.constant 0 : index
    %c0_2 = arith.constant 0 : index
    %2 = vector.load %arg2[%c0_1, %c0_2] : memref<784x128xbf16, #tpu.memory_space<vmem>>, vector<784x128xbf16>
    %cst = arith.constant dense<0.000000e+00> : vector<104x128xf32>
    %3 = tpu.matmul %1, %2, %cst {dimension_numbers = #tpu.dot_dimension_numbers<[1], [0], [0], [1], [0, 0, 1, 1], [], []>} : vector<104x784xbf16>, vector<784x128xbf16>, vector<104x128xf32> -> vector<104x128xf32>
    %c0_3 = arith.constant 0 : index
    %c0_4 = arith.constant 0 : index
    %4 = vector.load %arg3[%c0_3, %c0_4] : memref<1x128xf32, #tpu.memory_space<vmem>>, vector<1x128xf32>
    %5 = vector.broadcast %4 : vector<1x128xf32> to vector<104x128xf32>
    %6 = arith.addf %3, %5 : vector<104x128xf32>
    %cst_5 = arith.constant 0.000000e+00 : f32
    %7 = vector.broadcast %cst_5 : f32 to vector<104x128xf32>
    %8 = arith.maximumf %6, %7 : vector<104x128xf32>
    %9 = arith.truncf %8 : vector<104x128xf32> to vector<104x128xbf16>
    %c0_6 = arith.constant 0 : index
    %c0_7 = arith.constant 0 : index
    %10 = vector.load %arg4[%c0_6, %c0_7] : memref<128x128xbf16, #tpu.memory_space<vmem>>, vector<128x128xbf16>
    %cst_8 = arith.constant dense<0.000000e+00> : vector<104x128xf32>
    %11 = tpu.matmul %9, %10, %cst_8 {dimension_numbers = #tpu.dot_dimension_numbers<[1], [0], [0], [1], [0, 0, 1, 1], [], []>} : vector<104x128xbf16>, vector<128x128xbf16>, vector<104x128xf32> -> vector<104x128xf32>
    %c0_9 = arith.constant 0 : index
    %c0_10 = arith.constant 0 : index
    %12 = vector.load %arg5[%c0_9, %c0_10] : memref<1x128xf32, #tpu.memory_space<vmem>>, vector<1x128xf32>
    %13 = vector.broadcast %12 : vector<1x128xf32> to vector<104x128xf32>
    %14 = arith.addf %11, %13 : vector<104x128xf32>
    %cst_11 = arith.constant 0.000000e+00 : f32
    %15 = vector.broadcast %cst_11 : f32 to vector<104x128xf32>
    %16 = arith.maximumf %14, %15 : vector<104x128xf32>
    %17 = arith.truncf %16 : vector<104x128xf32> to vector<104x128xbf16>
    %c0_12 = arith.constant 0 : index
    %c0_13 = arith.constant 0 : index
    %18 = vector.load %arg6[%c0_12, %c0_13] : memref<128x128xbf16, #tpu.memory_space<vmem>>, vector<128x128xbf16>
    %cst_14 = arith.constant dense<0.000000e+00> : vector<104x128xf32>
    %19 = tpu.matmul %17, %18, %cst_14 {dimension_numbers = #tpu.dot_dimension_numbers<[1], [0], [0], [1], [0, 0, 1, 1], [], []>} : vector<104x128xbf16>, vector<128x128xbf16>, vector<104x128xf32> -> vector<104x128xf32>
    %c0_15 = arith.constant 0 : index
    %c0_16 = arith.constant 0 : index
    %20 = vector.load %arg7[%c0_15, %c0_16] : memref<1x128xf32, #tpu.memory_space<vmem>>, vector<1x128xf32>
    %21 = vector.broadcast %20 : vector<1x128xf32> to vector<104x128xf32>
    %22 = arith.addf %19, %21 : vector<104x128xf32>
    %c0_17 = arith.constant 0 : index
    %c0_18 = arith.constant 0 : index
    %23 = vector.load %arg8[%c0_17, %c0_18] : memref<104x128xf32, #tpu.memory_space<vmem>>, vector<104x128xf32>
    tpu.vector_store %arg8[%c0_17, %c0_18], %22 {strides = array<i32>} : memref<104x128xf32, #tpu.memory_space<vmem>>, vector<104x128xf32>,
    return
  }
  func.func @transform_0(%arg0: i32) -> (i32, i32) {
    %c0_i32 = arith.constant 0 : i32
    %c0_i32_0 = arith.constant 0 : i32
    return %arg0, %c0_i32 : i32, i32
  }
  func.func @transform_1(%arg0: i32) -> (i32, i32) {
    %c0_i32 = arith.constant 0 : i32
    %c0_i32_0 = arith.constant 0 : i32
    %c0_i32_1 = arith.constant 0 : i32
    return %c0_i32, %c0_i32_0 : i32, i32
  }
  func.func @transform_2(%arg0: i32) -> (i32, i32) {
    %c0_i32 = arith.constant 0 : i32
    %c0_i32_0 = arith.constant 0 : i32
    %c0_i32_1 = arith.constant 0 : i32
    return %c0_i32, %c0_i32_0 : i32, i32
  }
  func.func @transform_3(%arg0: i32) -> (i32, i32) {
    %c0_i32 = arith.constant 0 : i32
    %c0_i32_0 = arith.constant 0 : i32
    %c0_i32_1 = arith.constant 0 : i32
    return %c0_i32, %c0_i32_0 : i32, i32
  }
  func.func @transform_4(%arg0: i32) -> (i32, i32) {
    %c0_i32 = arith.constant 0 : i32
    %c0_i32_0 = arith.constant 0 : i32
    %c0_i32_1 = arith.constant 0 : i32
    return %c0_i32, %c0_i32_0 : i32, i32
  }
  func.func @transform_5(%arg0: i32) -> (i32, i32) {
    %c0_i32 = arith.constant 0 : i32
    %c0_i32_0 = arith.constant 0 : i32
    %c0_i32_1 = arith.constant 0 : i32
    return %c0_i32, %c0_i32_0 : i32, i32
  }
  func.func @transform_6(%arg0: i32) -> (i32, i32) {
    %c0_i32 = arith.constant 0 : i32
    %c0_i32_0 = arith.constant 0 : i32
    %c0_i32_1 = arith.constant 0 : i32
    return %c0_i32, %c0_i32_0 : i32, i32
  }
  func.func @transform_7(%arg0: i32) -> (i32, i32) {
    %c0_i32 = arith.constant 0 : i32
    %c0_i32_0 = arith.constant 0 : i32
    return %arg0, %c0_i32 : i32, i32
  }
}

</mosaic_0001>

<llo_original>
// kernel: tpu_custom_call.1
$region0: #{tpu_custom_call.1}
  #allocation0 [shape = 'u32[]', space=smem, size = 0x4, offset = 0x4, fixed_abs, tag = 'smem constant byte address 0x4 - core index']
  #allocation1 [shape = 'u32[144,128]{1,0:T(1,128)}', space=vmem, size = 0x12000, scoped, tag = 'internal scratch']
  %s0 = inlined_call_operand.hbm [shape: f32[200,784], index: 0, kind: input, shape index: {}]
  %s1 = inlined_call_operand.hbm [shape: bf16[784,128], index: 1, kind: input, shape index: {}]
  %s2 = inlined_call_operand.vmem [shape: f32[1,128], index: 2, kind: input, shape index: {}]
  %s3 = inlined_call_operand.hbm [shape: bf16[128,128], index: 3, kind: input, shape index: {}]
  %s4 = inlined_call_operand.vmem [shape: f32[1,128], index: 4, kind: input, shape index: {}]
  %s5 = inlined_call_operand.hbm [shape: bf16[128,128], index: 5, kind: input, shape index: {}]
  %s6 = inlined_call_operand.vmem [shape: f32[1,128], index: 6, kind: input, shape index: {}]
  %s7 = inlined_call_operand.hbm [shape: f32[200,128], index: 7, kind: output, shape index: {}]
  %s8 = sld [smem:[#allocation0]]
  $region77: #{tpu_custom_call.1} parent=0
    _
  %s10 = ssub.s32 1, %s8
  %s11 = scalar_select 0, %s10, %s8
  $region1: #{tpu_custom_call.1} parent=0
    #allocation2 [shape = 'u8[745472]{0}', space=vmem, size = 0xb6000, scoped, tag = 'input window, operand 0']
    #allocation3 [shape = 's32[2]{0}', space=sflag, size = 0x8, scoped, tag = 'scoped memory for tpu_custom_call.1']
    #allocation4 [shape = 's32[2]{0}', space=sflag, size = 0x8, scoped, tag = 'scoped memory for tpu_custom_call.1']
    #allocation5 [shape = 'u8[200704]{0}', space=vmem, size = 0x31000, scoped, tag = 'input window, operand 1, single buffered']
    #allocation6 [shape = 's32[1]{0}', space=sflag, size = 0x4, scoped, tag = 'scoped memory for tpu_custom_call.1']
    #allocation7 [shape = 'u8[32768]{0}', space=vmem, size = 0x8000, scoped, tag = 'input window, operand 3, single buffered']
    #allocation8 [shape = 'u8[32768]{0}', space=vmem, size = 0x8000, scoped, tag = 'input window, operand 5, single buffered']
    #allocation9 [shape = 's32[1]{0}', space=sflag, size = 0x4, scoped, tag = 'scoped memory for tpu_custom_call.1']
    #allocation10 [shape = 'u8[106496]{0}', space=vmem, size = 0x1a000, scoped, tag = 'output window, operand 0']
    %12 = vsyncpa [#allocation3], 0
    %s13 = scalar_lea.sflag [#allocation3], 1
    %14 = vsyncpa %s13, 0
    %15 = vsyncpa [#allocation6], 0
    %16 = vsyncpa [#allocation9], 0
    %17 = vsyncpa [#allocation4], 0
    %s18 = scalar_lea.sflag [#allocation4], 1
    %19 = vsyncpa %s18, 0
    loop: start=0, step=1, limit=4
    $region2: #{tpu_custom_call.1} parent=1 // loop_pre_header
      _
    $region3: #{tpu_custom_call.1} parent=1 // loop_header
      %s21 = sphi 0, %s25
      %p22 = scmp.ge.s32.totalorder %s21, 4
      %s31 = sphi 0, %s33
      %s34 = sphi 0, %s31
      %s35 = sphi 0, %s34
      %s51 = sphi 0, %s35
      %s55 = sphi 0, %s55
      %s57 = sphi 0, %s55
      %s58 = sphi 0, %s57
      %s72 = sphi 0, %s58
      %s76 = sphi 0, %s76
      %s78 = sphi 0, %s76
      %s79 = sphi 0, %s78
      %s93 = sphi 0, %s79
      %s97 = sphi 0, %s97
      %s99 = sphi 0, %s97
      %s100 = sphi 0, %s99
      %s114 = sphi 0, %s100
      %s118 = sphi 0, %s118
      %s120 = sphi 0, %s118
      %s121 = sphi 0, %s120
      %s135 = sphi 0, %s121
      %s139 = sphi 0, %s139
      %s141 = sphi 0, %s139
      %s142 = sphi 0, %s141
      %s156 = sphi 0, %s142
      %s160 = sphi 0, %s160
      %s162 = sphi 0, %s160
      %s163 = sphi 0, %s162
      %s177 = sphi 0, %s163
      %s183 = sphi 0, %s185
      %s186 = sphi 0, %s183
      %s187 = sphi 0, %s186
      %s203 = sphi 0, %s187
    $region4: #{tpu_custom_call.1} parent=1 // loop_header_branch
      %24 = sbr.rel (%p22) target = $region8
    $region5: #{tpu_custom_call.1} parent=1 // loop_body
      %s26 = ssub.s32 %s21, 1
      %s27 = ssub.s32 %s21, 2
      %s28 = sadd.s32 %s21, 1
      %s29 = ssub.s32 %s21, %s28
      %p30 = scmp.eq.s32.totalorder %s29, 0
      %s32 = sadd.s32 %s31, 1
      %s33 = scalar_select %p30, %s31, %s32
      %p36 = pneg %p30
      %p37 = scmp.eq.s32.totalorder %s21, 1
      %p38 = por %p36, %p37
      %p39 = scmp.ne.s32.totalorder %s31, %s34
      %p40 = scmp.eq.s32.totalorder %s21, 0
      %p41 = por %p39, %p40
      %p42 = scmp.ne.s32.totalorder %s31, %s34
      %p43 = scmp.eq.s32.totalorder %s26, 1
      %p44 = por %p42, %p43
      %p45 = scmp.ne.s32.totalorder %s34, %s35
      %p46 = scmp.eq.s32.totalorder %s26, 0
      %p47 = por %p45, %p46
      %p48 = scmp.ne.s32.totalorder %s34, %s35
      %p49 = scmp.eq.s32.totalorder %s27, 1
      %p50 = por %p48, %p49
      %p52 = scmp.ne.s32.totalorder %s35, %s51
      %p53 = scmp.eq.s32.totalorder %s27, 0
      %p54 = por %p52, %p53
      %s56 = sadd.s32 %s55, 1
      %p59 = scmp.eq.s32.totalorder %s21, 1
      %p60 = scmp.ne.s32.totalorder %s55, %s57
      %p61 = scmp.eq.s32.totalorder %s21, 0
      %p62 = por %p60, %p61
      %p63 = scmp.ne.s32.totalorder %s55, %s57
      %p64 = scmp.eq.s32.totalorder %s26, 1
      %p65 = por %p63, %p64
      %p66 = scmp.ne.s32.totalorder %s57, %s58
      %p67 = scmp.eq.s32.totalorder %s26, 0
      %p68 = por %p66, %p67
      %p69 = scmp.ne.s32.totalorder %s57, %s58
      %p70 = scmp.eq.s32.totalorder %s27, 1
      %p71 = por %p69, %p70
      %p73 = scmp.ne.s32.totalorder %s58, %s72
      %p74 = scmp.eq.s32.totalorder %s27, 0
      %p75 = por %p73, %p74
      %s77 = sadd.s32 %s76, 1
      %p80 = scmp.eq.s32.totalorder %s21, 1
      %p81 = scmp.ne.s32.totalorder %s76, %s78
      %p82 = scmp.eq.s32.totalorder %s21, 0
      %p83 = por %p81, %p82
      %p84 = scmp.ne.s32.totalorder %s76, %s78
      %p85 = scmp.eq.s32.totalorder %s26, 1
      %p86 = por %p84, %p85
      %p87 = scmp.ne.s32.totalorder %s78, %s79
      %p88 = scmp.eq.s32.totalorder %s26, 0
      %p89 = por %p87, %p88
      %p90 = scmp.ne.s32.totalorder %s78, %s79
      %p91 = scmp.eq.s32.totalorder %s27, 1
      %p92 = por %p90, %p91
      %p94 = scmp.ne.s32.totalorder %s79, %s93
      %p95 = scmp.eq.s32.totalorder %s27, 0
      %p96 = por %p94, %p95
      %s98 = sadd.s32 %s97, 1
      %p101 = scmp.eq.s32.totalorder %s21, 1
      %p102 = scmp.ne.s32.totalorder %s97, %s99
      %p103 = scmp.eq.s32.totalorder %s21, 0
      %p104 = por %p102, %p103
      %p105 = scmp.ne.s32.totalorder %s97, %s99
      %p106 = scmp.eq.s32.totalorder %s26, 1
      %p107 = por %p105, %p106
      %p108 = scmp.ne.s32.totalorder %s99, %s100
      %p109 = scmp.eq.s32.totalorder %s26, 0
      %p110 = por %p108, %p109
      %p111 = scmp.ne.s32.totalorder %s99, %s100
      %p112 = scmp.eq.s32.totalorder %s27, 1
      %p113 = por %p111, %p112
      %p115 = scmp.ne.s32.totalorder %s100, %s114
      %p116 = scmp.eq.s32.totalorder %s27, 0
      %p117 = por %p115, %p116
      %s119 = sadd.s32 %s118, 1
      %p122 = scmp.eq.s32.totalorder %s21, 1
      %p123 = scmp.ne.s32.totalorder %s118, %s120
      %p124 = scmp.eq.s32.totalorder %s21, 0
      %p125 = por %p123, %p124
      %p126 = scmp.ne.s32.totalorder %s118, %s120
      %p127 = scmp.eq.s32.totalorder %s26, 1
      %p128 = por %p126, %p127
      %p129 = scmp.ne.s32.totalorder %s120, %s121
      %p130 = scmp.eq.s32.totalorder %s26, 0
      %p131 = por %p129, %p130
      %p132 = scmp.ne.s32.totalorder %s120, %s121
      %p133 = scmp.eq.s32.totalorder %s27, 1
      %p134 = por %p132, %p133
      %p136 = scmp.ne.s32.totalorder %s121, %s135
      %p137 = scmp.eq.s32.totalorder %s27, 0
      %p138 = por %p136, %p137
      %s140 = sadd.s32 %s139, 1
      %p143 = scmp.eq.s32.totalorder %s21, 1
      %p144 = scmp.ne.s32.totalorder %s139, %s141
      %p145 = scmp.eq.s32.totalorder %s21, 0
      %p146 = por %p144, %p145
      %p147 = scmp.ne.s32.totalorder %s139, %s141
      %p148 = scmp.eq.s32.totalorder %s26, 1
      %p149 = por %p147, %p148
      %p150 = scmp.ne.s32.totalorder %s141, %s142
      %p151 = scmp.eq.s32.totalorder %s26, 0
      %p152 = por %p150, %p151
      %p153 = scmp.ne.s32.totalorder %s141, %s142
      %p154 = scmp.eq.s32.totalorder %s27, 1
      %p155 = por %p153, %p154
      %p157 = scmp.ne.s32.totalorder %s142, %s156
      %p158 = scmp.eq.s32.totalorder %s27, 0
      %p159 = por %p157, %p158
      %s161 = sadd.s32 %s160, 1
      %p164 = scmp.eq.s32.totalorder %s21, 1
      %p165 = scmp.ne.s32.totalorder %s160, %s162
      %p166 = scmp.eq.s32.totalorder %s21, 0
      %p167 = por %p165, %p166
      %p168 = scmp.ne.s32.totalorder %s160, %s162
      %p169 = scmp.eq.s32.totalorder %s26, 1
      %p170 = por %p168, %p169
      %p171 = scmp.ne.s32.totalorder %s162, %s163
      %p172 = scmp.eq.s32.totalorder %s26, 0
      %p173 = por %p171, %p172
      %p174 = scmp.ne.s32.totalorder %s162, %s163
      %p175 = scmp.eq.s32.totalorder %s27, 1
      %p176 = por %p174, %p175
      %p178 = scmp.ne.s32.totalorder %s163, %s177
      %p179 = scmp.eq.s32.totalorder %s27, 0
      %p180 = por %p178, %p179
      %s181 = ssub.s32 %s21, %s28
      %p182 = scmp.eq.s32.totalorder %s181, 0
      %s184 = sadd.s32 %s183, 1
      %s185 = scalar_select %p182, %s183, %s184
      %p188 = pneg %p182
      %p189 = scmp.eq.s32.totalorder %s21, 1
      %p190 = por %p188, %p189
      %p191 = scmp.ne.s32.totalorder %s183, %s186
      %p192 = scmp.eq.s32.totalorder %s21, 0
      %p193 = por %p191, %p192
      %p194 = scmp.ne.s32.totalorder %s183, %s186
      %p195 = scmp.eq.s32.totalorder %s26, 1
      %p196 = por %p194, %p195
      %p197 = scmp.ne.s32.totalorder %s186, %s187
      %p198 = scmp.eq.s32.totalorder %s26, 0
      %p199 = por %p197, %p198
      %p200 = scmp.ne.s32.totalorder %s186, %s187
      %p201 = scmp.eq.s32.totalorder %s27, 1
      %p202 = por %p200, %p201
      %p204 = scmp.ne.s32.totalorder %s187, %s203
      %p205 = scmp.eq.s32.totalorder %s27, 0
      %p206 = por %p204, %p205
      %p207 = scmp.le.s32.totalorder 1, %s21
      %p208 = scmp.lt.s32.totalorder %s21, 3
      %p209 = pnand %p207, %p208
      %p210 = pneg %p209
      // Predicated region
      $region9: #{tpu_custom_call.1} parent=5 // pred_check
        _
      $region10: #{tpu_custom_call.1} parent=5 // pred_check_branch
        %212 = sbr.rel (%p209) target = $region12
      $region11: #{tpu_custom_call.1} parent=5 // pred_region
        %s213 = ssub.s32 %s21, 1
        // Predicated region
        $region13: #{tpu_custom_call.1} parent=11 // pred_check
          %p214 = pneg %p68
        $region14: #{tpu_custom_call.1} parent=11 // pred_check_branch
          %216 = sbr.rel (%p214) target = $region16
        $region15: #{tpu_custom_call.1} parent=11 // pred_region
          %s218 = ssub.s32 6272, 6272
          %219 = vsyncadd [#allocation6], %s218
          %s220 = sshll.u32 [#allocation5], 4
          %s221 = int_to_ptr.vmem [resolvable:$true] %s220
          %226 = dma.hbm_to_vmem [thread:$0]  %s1, 6272, %s221, [#allocation6], 64, 64, 4
        $region16: #{tpu_custom_call.1} parent=11 // pred_fallthru
          _
        // Predicated region
        $region17: #{tpu_custom_call.1} parent=11 // pred_check
          %p227 = pneg %p89
        $region18: #{tpu_custom_call.1} parent=11 // pred_check_branch
          %229 = sbr.rel (%p227) target = $region20
        $region19: #{tpu_custom_call.1} parent=11 // pred_region
          _
        $region20: #{tpu_custom_call.1} parent=11 // pred_fallthru
          _
        // Predicated region
        $region21: #{tpu_custom_call.1} parent=11 // pred_check
          %p230 = pneg %p110
        $region22: #{tpu_custom_call.1} parent=11 // pred_check_branch
          %232 = sbr.rel (%p230) target = $region24
        $region23: #{tpu_custom_call.1} parent=11 // pred_region
          %s234 = ssub.s32 1024, 1024
          %235 = vsyncadd [#allocation6], %s234
          %s236 = sshll.u32 [#allocation7], 4
          %s237 = int_to_ptr.vmem [resolvable:$true] %s236
          %242 = dma.hbm_to_vmem [thread:$0]  %s3, 1024, %s237, [#allocation6], 64, 64, 4
        $region24: #{tpu_custom_call.1} parent=11 // pred_fallthru
          _
        // Predicated region
        $region25: #{tpu_custom_call.1} parent=11 // pred_check
          %p243 = pneg %p131
        $region26: #{tpu_custom_call.1} parent=11 // pred_check_branch
          %245 = sbr.rel (%p243) target = $region28
        $region27: #{tpu_custom_call.1} parent=11 // pred_region
          _
        $region28: #{tpu_custom_call.1} parent=11 // pred_fallthru
          _
        // Predicated region
        $region29: #{tpu_custom_call.1} parent=11 // pred_check
          %p246 = pneg %p152
        $region30: #{tpu_custom_call.1} parent=11 // pred_check_branch
          %248 = sbr.rel (%p246) target = $region32
        $region31: #{tpu_custom_call.1} parent=11 // pred_region
          %s250 = ssub.s32 1024, 1024
          %251 = vsyncadd [#allocation9], %s250
          %s252 = sshll.u32 [#allocation8], 4
          %s253 = int_to_ptr.vmem [resolvable:$true] %s252
          %258 = dma.hbm_to_vmem [thread:$0]  %s5, 1024, %s253, [#allocation9], 64, 64, 4
        $region32: #{tpu_custom_call.1} parent=11 // pred_fallthru
          _
        // Predicated region
        $region33: #{tpu_custom_call.1} parent=11 // pred_check
          %p259 = pneg %p173
        $region34: #{tpu_custom_call.1} parent=11 // pred_check_branch
          %261 = sbr.rel (%p259) target = $region36
        $region35: #{tpu_custom_call.1} parent=11 // pred_region
          _
        $region36: #{tpu_custom_call.1} parent=11 // pred_fallthru
          _
      $region12: #{tpu_custom_call.1} parent=5 // pred_fallthru
        _
      %p262 = scmp.lt.s32.totalorder %s21, 2
      // Predicated region
      $region37: #{tpu_custom_call.1} parent=5 // pred_check
        %p263 = pneg %p262
      $region38: #{tpu_custom_call.1} parent=5 // pred_check_branch
        %265 = sbr.rel (%p263) target = $region40
      $region39: #{tpu_custom_call.1} parent=5 // pred_region
        // Predicated region
        $region41: #{tpu_custom_call.1} parent=39 // pred_check
          %p266 = pneg %p41
        $region42: #{tpu_custom_call.1} parent=39 // pred_check_branch
          %268 = sbr.rel (%p266) target = $region44
        $region43: #{tpu_custom_call.1} parent=39 // pred_region
          %s269 = sand.u32 %s31, 1
          %s270 = scalar_lea.sflag [#allocation3], %s269
          %s271 = sand.u32 %s31, 1
          %s272 = smul.addr %s271, 728
          %s273 = scalar_lea.vmem [#allocation2], %s272
          %s274 = smul.u32 13, %s21
          %s275 = ssub.s32 25, %s274
          %p276 = scmp.lt.s32.totalorder %s275, 13
          %s277 = scalar_select %p276, %s275, 13
          %s278 = smul.u32 128, %s277
          %s279 = smul.u32 %s278, 7
          %s281 = ssub.s32 11648, %s279
          %282 = vsyncadd %s270, %s281
          %p283 = scmp.ne.s32.totalorder 0, %s279
          %s284 = smul.addr %s274, 7
          %s285 = smul.addr %s284, 128
          %s286 = scalar_lea.hbm %s0, %s285
          %s287 = smul.u32 56, %s277
          %s288 = sshll.u32 %s273, 4
          %s289 = int_to_ptr.vmem [resolvable:$true] %s288
          %s290 = sshll.u32 %s287, 4
          %294 = dma.hbm_to_vmem [thread:$0]  (%p283), %s286, %s290, %s289, %s270, 896, 896, 56
        $region44: #{tpu_custom_call.1} parent=39 // pred_fallthru
          _
      $region40: #{tpu_custom_call.1} parent=5 // pred_fallthru
        _
      %p295 = scmp.le.s32.totalorder 1, %s21
      %p296 = scmp.lt.s32.totalorder %s21, 3
      %p297 = pnand %p295, %p296
      %p298 = pneg %p297
      // Predicated region
      $region45: #{tpu_custom_call.1} parent=5 // pred_check
        _
      $region46: #{tpu_custom_call.1} parent=5 // pred_check_branch
        %300 = sbr.rel (%p297) target = $region48
      $region47: #{tpu_custom_call.1} parent=5 // pred_region
        %s301 = ssub.s32 %s21, 1
        %s302 = sand.u32 %s34, 1
        %s303 = scalar_lea.sflag [#allocation3], %s302
        %s304 = sand.u32 %s34, 1
        %s305 = smul.addr %s304, 728
        %s306 = scalar_lea.vmem [#allocation2], %s305
        // Predicated region
        $region49: #{tpu_custom_call.1} parent=47 // pred_check
          %p307 = pneg %p47
        $region50: #{tpu_custom_call.1} parent=47 // pred_check_branch
          %309 = sbr.rel (%p307) target = $region52
        $region51: #{tpu_custom_call.1} parent=47 // pred_region
          %310 = dma.done %s303, 11648
        $region52: #{tpu_custom_call.1} parent=47 // pred_fallthru
          _
        // Predicated region
        $region53: #{tpu_custom_call.1} parent=47 // pred_check
          %p311 = pneg %p68
        $region54: #{tpu_custom_call.1} parent=47 // pred_check_branch
          %313 = sbr.rel (%p311) target = $region56
        $region55: #{tpu_custom_call.1} parent=47 // pred_region
          %314 = dma.done [#allocation6], 6272
        $region56: #{tpu_custom_call.1} parent=47 // pred_fallthru
          _
        // Predicated region
        $region57: #{tpu_custom_call.1} parent=47 // pred_check
          %p315 = pneg %p110
        $region58: #{tpu_custom_call.1} parent=47 // pred_check_branch
          %317 = sbr.rel (%p315) target = $region60
        $region59: #{tpu_custom_call.1} parent=47 // pred_region
          %318 = dma.done [#allocation6], 1024
        $region60: #{tpu_custom_call.1} parent=47 // pred_fallthru
          _
        // Predicated region
        $region61: #{tpu_custom_call.1} parent=47 // pred_check
          %p319 = pneg %p152
        $region62: #{tpu_custom_call.1} parent=47 // pred_check_branch
          %321 = sbr.rel (%p319) target = $region64
        $region63: #{tpu_custom_call.1} parent=47 // pred_region
          %322 = dma.done [#allocation9], 1024
        $region64: #{tpu_custom_call.1} parent=47 // pred_fallthru
          _
        %s323 = sand.u32 %s34, 1
        %s324 = scalar_lea.sflag [#allocation3], %s323
        %s325 = sand.u32 %s34, 1
        %s326 = smul.addr %s325, 728
        %s327 = scalar_lea.vmem [#allocation2], %s326
        %p328 = pneg %p47
        %p329 = pneg %p44
        %p330 = pneg %p68
        %p331 = pneg %p65
        %p332 = pneg %p89
        %p333 = pneg %p86
        %p334 = pneg %p110
        %p335 = pneg %p107
        %p336 = pneg %p131
        %p337 = pneg %p128
        %p338 = pneg %p152
        %p339 = pneg %p149
        %p340 = pneg %p173
        %p341 = pneg %p170
        %p342 = pneg %p199
        %p343 = pneg %p196
        %s344 = sand.u32 %s186, 1
        %s345 = scalar_lea.sflag [#allocation4], %s344
        %s346 = sand.u32 %s186, 1
        %s347 = smul.addr %s346, 104
        %s348 = scalar_lea.vmem [#allocation10], %s347
        %s349 = smul.u32 13, %s26
        %s350 = ssub.s32 25, %s349
        %p351 = scmp.lt.s32.totalorder %s350, 13
        %s352 = scalar_select %p351, %s350, 13
        %s353 = smul.u32 128, %s352
        %s354 = smul.u32 %s353, 7
        %s355 = smul.u32 13, %s26
        %s356 = ssub.s32 25, %s355
        %p357 = scmp.lt.s32.totalorder %s356, 13
        %s358 = scalar_select %p357, %s356, 13
        %s359 = smul.u32 128, %s358
        %v361 = vld [vmem:[%s306] sm:$0xff]
        %v362 = vld [vmem:[%s306 + $0x8] sm:$0xff]
        %v363 = vld [vmem:[%s306 + $0x10] sm:$0xff]
        %v364 = vld [vmem:[%s306 + $0x18] sm:$0xff]
        %v365 = vld [vmem:[%s306 + $0x20] sm:$0xff]
        %v366 = vld [vmem:[%s306 + $0x28] sm:$0xff]
        %v367 = vld [vmem:[%s306 + $0x30] sm:$0xff]
        %v368 = vld [vmem:[%s306 + $0x38] sm:$0xff]
        %v369 = vld [vmem:[%s306 + $0x40] sm:$0xff]
        %v370 = vld [vmem:[%s306 + $0x48] sm:$0xff]
        %v371 = vld [vmem:[%s306 + $0x50] sm:$0xff]
        %v372 = vld [vmem:[%s306 + $0x58] sm:$0xff]
        %v373 = vld [vmem:[%s306 + $0x60] sm:$0xff]
        %v374 = vld [vmem:[%s306 + $0x68] sm:$0xff]
        %v375 = vld [vmem:[%s306 + $0x70] sm:$0xff]
        %v376 = vld [vmem:[%s306 + $0x78] sm:$0xff]
        %v377 = vld [vmem:[%s306 + $0x80] sm:$0xff]
        %v378 = vld [vmem:[%s306 + $0x88] sm:$0xff]
        %v379 = vld [vmem:[%s306 + $0x90] sm:$0xff]
        %v380 = vld [vmem:[%s306 + $0x98] sm:$0xff]
        %v381 = vld [vmem:[%s306 + $0xa0] sm:$0xff]
        %v382 = vld [vmem:[%s306 + $0xa8] sm:$0xff]
        %v383 = vld [vmem:[%s306 + $0xb0] sm:$0xff]
        %v384 = vld [vmem:[%s306 + $0xb8] sm:$0xff]
        %v385 = vld [vmem:[%s306 + $0xc0] sm:$0xff]
        %v386 = vld [vmem:[%s306 + $0xc8] sm:$0xff]
        %v387 = vld [vmem:[%s306 + $0xd0] sm:$0xff]
        %v388 = vld [vmem:[%s306 + $0xd8] sm:$0xff]
        %v389 = vld [vmem:[%s306 + $0xe0] sm:$0xff]
        %v390 = vld [vmem:[%s306 + $0xe8] sm:$0xff]
        %v391 = vld [vmem:[%s306 + $0xf0] sm:$0xff]
        %v392 = vld [vmem:[%s306 + $0xf8] sm:$0xff]
        %v393 = vld [vmem:[%s306 + $0x100] sm:$0xff]
        %v394 = vld [vmem:[%s306 + $0x108] sm:$0xff]
        %v395 = vld [vmem:[%s306 + $0x110] sm:$0xff]
        %v396 = vld [vmem:[%s306 + $0x118] sm:$0xff]
        %v397 = vld [vmem:[%s306 + $0x120] sm:$0xff]
        %v398 = vld [vmem:[%s306 + $0x128] sm:$0xff]
        %v399 = vld [vmem:[%s306 + $0x130] sm:$0xff]
        %v400 = vld [vmem:[%s306 + $0x138] sm:$0xff]
        %v401 = vld [vmem:[%s306 + $0x140] sm:$0xff]
        %v402 = vld [vmem:[%s306 + $0x148] sm:$0xff]
        %v403 = vld [vmem:[%s306 + $0x150] sm:$0xff]
        %v404 = vld [vmem:[%s306 + $0x158] sm:$0xff]
        %v405 = vld [vmem:[%s306 + $0x160] sm:$0xff]
        %v406 = vld [vmem:[%s306 + $0x168] sm:$0xff]
        %v407 = vld [vmem:[%s306 + $0x170] sm:$0xff]
        %v408 = vld [vmem:[%s306 + $0x178] sm:$0xff]
        %v409 = vld [vmem:[%s306 + $0x180] sm:$0xff]
        %v410 = vld [vmem:[%s306 + $0x188] sm:$0xff]
        %v411 = vld [vmem:[%s306 + $0x190] sm:$0xff]
        %v412 = vld [vmem:[%s306 + $0x198] sm:$0xff]
        %v413 = vld [vmem:[%s306 + $0x1a0] sm:$0xff]
        %v414 = vld [vmem:[%s306 + $0x1a8] sm:$0xff]
        %v415 = vld [vmem:[%s306 + $0x1b0] sm:$0xff]
        %v416 = vld [vmem:[%s306 + $0x1b8] sm:$0xff]
        %v417 = vld [vmem:[%s306 + $0x1c0] sm:$0xff]
        %v418 = vld [vmem:[%s306 + $0x1c8] sm:$0xff]
        %v419 = vld [vmem:[%s306 + $0x1d0] sm:$0xff]
        %v420 = vld [vmem:[%s306 + $0x1d8] sm:$0xff]
        %v421 = vld [vmem:[%s306 + $0x1e0] sm:$0xff]
        %v422 = vld [vmem:[%s306 + $0x1e8] sm:$0xff]
        %v423 = vld [vmem:[%s306 + $0x1f0] sm:$0xff]
        %v424 = vld [vmem:[%s306 + $0x1f8] sm:$0xff]
        %v425 = vld [vmem:[%s306 + $0x200] sm:$0xff]
        %v426 = vld [vmem:[%s306 + $0x208] sm:$0xff]
        %v427 = vld [vmem:[%s306 + $0x210] sm:$0xff]
        %v428 = vld [vmem:[%s306 + $0x218] sm:$0xff]
        %v429 = vld [vmem:[%s306 + $0x220] sm:$0xff]
        %v430 = vld [vmem:[%s306 + $0x228] sm:$0xff]
        %v431 = vld [vmem:[%s306 + $0x230] sm:$0xff]
        %v432 = vld [vmem:[%s306 + $0x238] sm:$0xff]
        %v433 = vld [vmem:[%s306 + $0x240] sm:$0xff]
        %v434 = vld [vmem:[%s306 + $0x248] sm:$0xff]
        %v435 = vld [vmem:[%s306 + $0x250] sm:$0xff]
        %v436 = vld [vmem:[%s306 + $0x258] sm:$0xff]
        %v437 = vld [vmem:[%s306 + $0x260] sm:$0xff]
        %v438 = vld [vmem:[%s306 + $0x268] sm:$0xff]
        %v439 = vld [vmem:[%s306 + $0x270] sm:$0xff]
        %v440 = vld [vmem:[%s306 + $0x278] sm:$0xff]
        %v441 = vld [vmem:[%s306 + $0x280] sm:$0xff]
        %v442 = vld [vmem:[%s306 + $0x288] sm:$0xff]
        %v443 = vld [vmem:[%s306 + $0x290] sm:$0xff]
        %v444 = vld [vmem:[%s306 + $0x298] sm:$0xff]
        %v445 = vld [vmem:[%s306 + $0x2a0] sm:$0xff]
        %v446 = vld [vmem:[%s306 + $0x2a8] sm:$0xff]
        %v447 = vld [vmem:[%s306 + $0x2b0] sm:$0xff]
        %v448 = vld [vmem:[%s306 + $0x2b8] sm:$0xff]
        %v449 = vld [vmem:[%s306 + $0x2c0] sm:$0xff]
        %v450 = vld [vmem:[%s306 + $0x2c8] sm:$0xff]
        %v451 = vld [vmem:[%s306 + $0x2d0] sm:$0xff]
        %v452 = vpack.c.bf16 %v368, %v361
        %v453 = vpack.c.bf16 %v369, %v362
        %v454 = vpack.c.bf16 %v370, %v363
        %v455 = vpack.c.bf16 %v371, %v364
        %v456 = vpack.c.bf16 %v372, %v365
        %v457 = vpack.c.bf16 %v373, %v366
        %v458 = vpack.c.bf16 %v374, %v367
        %v459 = vpack.c.bf16 %v382, %v375
        %v460 = vpack.c.bf16 %v383, %v376
        %v461 = vpack.c.bf16 %v384, %v377
        %v462 = vpack.c.bf16 %v385, %v378
        %v463 = vpack.c.bf16 %v386, %v379
        %v464 = vpack.c.bf16 %v387, %v380
        %v465 = vpack.c.bf16 %v388, %v381
        %v466 = vpack.c.bf16 %v396, %v389
        %v467 = vpack.c.bf16 %v397, %v390
        %v468 = vpack.c.bf16 %v398, %v391
        %v469 = vpack.c.bf16 %v399, %v392
        %v470 = vpack.c.bf16 %v400, %v393
        %v471 = vpack.c.bf16 %v401, %v394
        %v472 = vpack.c.bf16 %v402, %v395
        %v473 = vpack.c.bf16 %v410, %v403
        %v474 = vpack.c.bf16 %v411, %v404
        %v475 = vpack.c.bf16 %v412, %v405
        %v476 = vpack.c.bf16 %v413, %v406
        %v477 = vpack.c.bf16 %v414, %v407
        %v478 = vpack.c.bf16 %v415, %v408
        %v479 = vpack.c.bf16 %v416, %v409
        %v480 = vpack.c.bf16 %v424, %v417
        %v481 = vpack.c.bf16 %v425, %v418
        %v482 = vpack.c.bf16 %v426, %v419
        %v483 = vpack.c.bf16 %v427, %v420
        %v484 = vpack.c.bf16 %v428, %v421
        %v485 = vpack.c.bf16 %v429, %v422
        %v486 = vpack.c.bf16 %v430, %v423
        %v487 = vpack.c.bf16 %v438, %v431
        %v488 = vpack.c.bf16 %v439, %v432
        %v489 = vpack.c.bf16 %v440, %v433
        %v490 = vpack.c.bf16 %v441, %v434
        %v491 = vpack.c.bf16 %v442, %v435
        %v492 = vpack.c.bf16 %v443, %v436
        %v493 = vpack.c.bf16 %v444, %v437
        %v494 = vpack.c.bf16 %v445, %v445
        %v495 = vpack.c.bf16 %v446, %v446
        %v496 = vpack.c.bf16 %v447, %v447
        %v497 = vpack.c.bf16 %v448, %v448
        %v498 = vpack.c.bf16 %v449, %v449
        %v499 = vpack.c.bf16 %v450, %v450
        %v500 = vpack.c.bf16 %v451, %v451
        %v501 = vld [vmem:[#allocation5] sm:$0xf]
        %v502 = vld [vmem:[#allocation5 + $0x4] sm:$0xf]
        %v503 = vld [vmem:[#allocation5 + $0x8] sm:$0xf]
        %v504 = vld [vmem:[#allocation5 + $0xc] sm:$0xf]
        %v505 = vld [vmem:[#allocation5 + $0x10] sm:$0xf]
        %v506 = vld [vmem:[#allocation5 + $0x14] sm:$0xf]
        %v507 = vld [vmem:[#allocation5 + $0x18] sm:$0xf]
        %v508 = vld [vmem:[#allocation5 + $0x1c] sm:$0xf]
        %v509 = vld [vmem:[#allocation5 + $0x20] sm:$0xf]
        %v510 = vld [vmem:[#allocation5 + $0x24] sm:$0xf]
        %v511 = vld [vmem:[#allocation5 + $0x28] sm:$0xf]
        %v512 = vld [vmem:[#allocation5 + $0x2c] sm:$0xf]
        %v513 = vld [vmem:[#allocation5 + $0x30] sm:$0xf]
        %v514 = vld [vmem:[#allocation5 + $0x34] sm:$0xf]
        %v515 = vld [vmem:[#allocation5 + $0x38] sm:$0xf]
        %v516 = vld [vmem:[#allocation5 + $0x3c] sm:$0xf]
        %v517 = vld [vmem:[#allocation5 + $0x40] sm:$0xf]
        %v518 = vld [vmem:[#allocation5 + $0x44] sm:$0xf]
        %v519 = vld [vmem:[#allocation5 + $0x48] sm:$0xf]
        %v520 = vld [vmem:[#allocation5 + $0x4c] sm:$0xf]
        %v521 = vld [vmem:[#allocation5 + $0x50] sm:$0xf]
        %v522 = vld [vmem:[#allocation5 + $0x54] sm:$0xf]
        %v523 = vld [vmem:[#allocation5 + $0x58] sm:$0xf]
        %v524 = vld [vmem:[#allocation5 + $0x5c] sm:$0xf]
        %v525 = vld [vmem:[#allocation5 + $0x60] sm:$0xf]
        %v526 = vld [vmem:[#allocation5 + $0x64] sm:$0xf]
        %v527 = vld [vmem:[#allocation5 + $0x68] sm:$0xf]
        %v528 = vld [vmem:[#allocation5 + $0x6c] sm:$0xf]
        %v529 = vld [vmem:[#allocation5 + $0x70] sm:$0xf]
        %v530 = vld [vmem:[#allocation5 + $0x74] sm:$0xf]
        %v531 = vld [vmem:[#allocation5 + $0x78] sm:$0xf]
        %v532 = vld [vmem:[#allocation5 + $0x7c] sm:$0xf]
        %v533 = vld [vmem:[#allocation5 + $0x80] sm:$0xf]
        %v534 = vld [vmem:[#allocation5 + $0x84] sm:$0xf]
        %v535 = vld [vmem:[#allocation5 + $0x88] sm:$0xf]
        %v536 = vld [vmem:[#allocation5 + $0x8c] sm:$0xf]
        %v537 = vld [vmem:[#allocation5 + $0x90] sm:$0xf]
        %v538 = vld [vmem:[#allocation5 + $0x94] sm:$0xf]
        %v539 = vld [vmem:[#allocation5 + $0x98] sm:$0xf]
        %v540 = vld [vmem:[#allocation5 + $0x9c] sm:$0xf]
        %v541 = vld [vmem:[#allocation5 + $0xa0] sm:$0xf]
        %v542 = vld [vmem:[#allocation5 + $0xa4] sm:$0xf]
        %v543 = vld [vmem:[#allocation5 + $0xa8] sm:$0xf]
        %v544 = vld [vmem:[#allocation5 + $0xac] sm:$0xf]
        %v545 = vld [vmem:[#allocation5 + $0xb0] sm:$0xf]
        %v546 = vld [vmem:[#allocation5 + $0xb4] sm:$0xf]
        %v547 = vld [vmem:[#allocation5 + $0xb8] sm:$0xf]
        %v548 = vld [vmem:[#allocation5 + $0xbc] sm:$0xf]
        %v549 = vld [vmem:[#allocation5 + $0xc0] sm:$0xf]
        %v550 = vld [vmem:[#allocation5 + $0xc4] sm:$0xf]
        %v551 = vld [vmem:[#allocation5 + $0xc8] sm:$0xf]
        %v552 = vld [vmem:[#allocation5 + $0xcc] sm:$0xf]
        %v553 = vld [vmem:[#allocation5 + $0xd0] sm:$0xf]
        %v554 = vld [vmem:[#allocation5 + $0xd4] sm:$0xf]
        %v555 = vld [vmem:[#allocation5 + $0xd8] sm:$0xf]
        %v556 = vld [vmem:[#allocation5 + $0xdc] sm:$0xf]
        %v557 = vld [vmem:[#allocation5 + $0xe0] sm:$0xf]
        %v558 = vld [vmem:[#allocation5 + $0xe4] sm:$0xf]
        %v559 = vld [vmem:[#allocation5 + $0xe8] sm:$0xf]
        %v560 = vld [vmem:[#allocation5 + $0xec] sm:$0xf]
        %v561 = vld [vmem:[#allocation5 + $0xf0] sm:$0xf]
        %v562 = vld [vmem:[#allocation5 + $0xf4] sm:$0xf]
        %v563 = vld [vmem:[#allocation5 + $0xf8] sm:$0xf]
        %v564 = vld [vmem:[#allocation5 + $0xfc] sm:$0xf]
        %v565 = vld [vmem:[#allocation5 + $0x100] sm:$0xf]
        %v566 = vld [vmem:[#allocation5 + $0x104] sm:$0xf]
        %v567 = vld [vmem:[#allocation5 + $0x108] sm:$0xf]
        %v568 = vld [vmem:[#allocation5 + $0x10c] sm:$0xf]
        %v569 = vld [vmem:[#allocation5 + $0x110] sm:$0xf]
        %v570 = vld [vmem:[#allocation5 + $0x114] sm:$0xf]
        %v571 = vld [vmem:[#allocation5 + $0x118] sm:$0xf]
        %v572 = vld [vmem:[#allocation5 + $0x11c] sm:$0xf]
        %v573 = vld [vmem:[#allocation5 + $0x120] sm:$0xf]
        %v574 = vld [vmem:[#allocation5 + $0x124] sm:$0xf]
        %v575 = vld [vmem:[#allocation5 + $0x128] sm:$0xf]
        %v576 = vld [vmem:[#allocation5 + $0x12c] sm:$0xf]
        %v577 = vld [vmem:[#allocation5 + $0x130] sm:$0xf]
        %v578 = vld [vmem:[#allocation5 + $0x134] sm:$0xf]
        %v579 = vld [vmem:[#allocation5 + $0x138] sm:$0xf]
        %v580 = vld [vmem:[#allocation5 + $0x13c] sm:$0xf]
        %v581 = vld [vmem:[#allocation5 + $0x140] sm:$0xf]
        %v582 = vld [vmem:[#allocation5 + $0x144] sm:$0xf]
        %v583 = vld [vmem:[#allocation5 + $0x148] sm:$0xf]
        %v584 = vld [vmem:[#allocation5 + $0x14c] sm:$0xf]
        %v585 = vld [vmem:[#allocation5 + $0x150] sm:$0xf]
        %v586 = vld [vmem:[#allocation5 + $0x154] sm:$0xf]
        %v587 = vld [vmem:[#allocation5 + $0x158] sm:$0xf]
        %v588 = vld [vmem:[#allocation5 + $0x15c] sm:$0xf]
        %v589 = vld [vmem:[#allocation5 + $0x160] sm:$0xf]
        %v590 = vld [vmem:[#allocation5 + $0x164] sm:$0xf]
        %v591 = vld [vmem:[#allocation5 + $0x168] sm:$0xf]
        %v592 = vld [vmem:[#allocation5 + $0x16c] sm:$0xf]
        %v593 = vld [vmem:[#allocation5 + $0x170] sm:$0xf]
        %v594 = vld [vmem:[#allocation5 + $0x174] sm:$0xf]
        %v595 = vld [vmem:[#allocation5 + $0x178] sm:$0xf]
        %v596 = vld [vmem:[#allocation5 + $0x17c] sm:$0xf]
        %v597 = vld [vmem:[#allocation5 + $0x180] sm:$0xf]
        %v598 = vld [vmem:[#allocation5 + $0x184] sm:$0xf]
        %v599 = vld [vmem:[%s2] sm:$0x1]
        %v601 = vlaneseq
        %v602 = vshrl.u32 %v601, 7
        %v603 = vsub.s32 0, %v602
        %v604 = vrot.slane %v599, %v603
        %v704 = vunpack.c.l.b16 %v501
        %v705 = vunpack.c.l.b16 %v502
        %v706 = vunpack.c.l.b16 %v503
        %v707 = vunpack.c.l.b16 %v504
        %v708 = vunpack.c.l.b16 %v505
        %v709 = vunpack.c.l.b16 %v506
        %v710 = vunpack.c.l.b16 %v507
        %v711 = vunpack.c.l.b16 %v508
        %v712 = vunpack.c.l.b16 %v509
        %v713 = vunpack.c.l.b16 %v510
        %v714 = vunpack.c.l.b16 %v511
        %v715 = vunpack.c.l.b16 %v512
        %v716 = vunpack.c.l.b16 %v513
        %v717 = vunpack.c.l.b16 %v514
        %v718 = vunpack.c.l.b16 %v515
        %v719 = vunpack.c.l.b16 %v516
        %v720 = vunpack.c.l.b16 %v517
        %v721 = vunpack.c.l.b16 %v518
        %v722 = vunpack.c.l.b16 %v519
        %v723 = vunpack.c.l.b16 %v520
        %v724 = vunpack.c.l.b16 %v521
        %v725 = vunpack.c.l.b16 %v522
        %v726 = vunpack.c.l.b16 %v523
        %v727 = vunpack.c.l.b16 %v524
        %v728 = vunpack.c.l.b16 %v525
        %v729 = vunpack.c.l.b16 %v526
        %v730 = vunpack.c.l.b16 %v527
        %v731 = vunpack.c.l.b16 %v528
        %v732 = vunpack.c.l.b16 %v529
        %v733 = vunpack.c.l.b16 %v530
        %v734 = vunpack.c.l.b16 %v531
        %v735 = vunpack.c.l.b16 %v532
        %v736 = vunpack.c.l.b16 %v533
        %v737 = vunpack.c.l.b16 %v534
        %v738 = vunpack.c.l.b16 %v535
        %v739 = vunpack.c.l.b16 %v536
        %v740 = vunpack.c.l.b16 %v537
        %v741 = vunpack.c.l.b16 %v538
        %v742 = vunpack.c.l.b16 %v539
        %v743 = vunpack.c.l.b16 %v540
        %v744 = vunpack.c.l.b16 %v541
        %v745 = vunpack.c.l.b16 %v542
        %v746 = vunpack.c.l.b16 %v543
        %v747 = vunpack.c.l.b16 %v544
        %v748 = vunpack.c.l.b16 %v545
        %v749 = vunpack.c.l.b16 %v546
        %v750 = vunpack.c.l.b16 %v547
        %v751 = vunpack.c.l.b16 %v548
        %v752 = vunpack.c.l.b16 %v549
        %v753 = vunpack.c.l.b16 %v550
        %v754 = vunpack.c.l.b16 %v551
        %v755 = vunpack.c.l.b16 %v552
        %v756 = vunpack.c.l.b16 %v553
        %v757 = vunpack.c.l.b16 %v554
        %v758 = vunpack.c.l.b16 %v555
        %v759 = vunpack.c.l.b16 %v556
        %v760 = vunpack.c.l.b16 %v557
        %v761 = vunpack.c.l.b16 %v558
        %v762 = vunpack.c.l.b16 %v559
        %v763 = vunpack.c.l.b16 %v560
        %v764 = vunpack.c.l.b16 %v561
        %v765 = vunpack.c.l.b16 %v562
        %v766 = vunpack.c.l.b16 %v563
        %v767 = vunpack.c.l.b16 %v564
        %v768 = vunpack.c.l.b16 %v565
        %v769 = vunpack.c.l.b16 %v566
        %v770 = vunpack.c.l.b16 %v567
        %v771 = vunpack.c.l.b16 %v568
        %v772 = vunpack.c.l.b16 %v569
        %v773 = vunpack.c.l.b16 %v570
        %v774 = vunpack.c.l.b16 %v571
        %v775 = vunpack.c.l.b16 %v572
        %v776 = vunpack.c.l.b16 %v573
        %v777 = vunpack.c.l.b16 %v574
        %v778 = vunpack.c.l.b16 %v575
        %v779 = vunpack.c.l.b16 %v576
        %v780 = vunpack.c.l.b16 %v577
        %v781 = vunpack.c.l.b16 %v578
        %v782 = vunpack.c.l.b16 %v579
        %v783 = vunpack.c.l.b16 %v580
        %v784 = vunpack.c.l.b16 %v581
        %v785 = vunpack.c.l.b16 %v582
        %v786 = vunpack.c.l.b16 %v583
        %v787 = vunpack.c.l.b16 %v584
        %v788 = vunpack.c.l.b16 %v585
        %v789 = vunpack.c.l.b16 %v586
        %v790 = vunpack.c.l.b16 %v587
        %v791 = vunpack.c.l.b16 %v588
        %v792 = vunpack.c.l.b16 %v589
        %v793 = vunpack.c.l.b16 %v590
        %v794 = vunpack.c.l.b16 %v591
        %v795 = vunpack.c.l.b16 %v592
        %v796 = vunpack.c.l.b16 %v593
        %v797 = vunpack.c.l.b16 %v594
        %v798 = vunpack.c.l.b16 %v595
        %v799 = vunpack.c.l.b16 %v596
        %v800 = vunpack.c.l.b16 %v597
        %v801 = vunpack.c.l.b16 %v598
        %v802 = vpack.c.b16 %v705, %v704
        %v803 = vpack.c.b16 %v707, %v706
        %v804 = vpack.c.b16 %v709, %v708
        %v805 = vpack.c.b16 %v711, %v710
        %v806 = vpack.c.b16 %v713, %v712
        %v807 = vpack.c.b16 %v715, %v714
        %v808 = vpack.c.b16 %v717, %v716
        %v809 = vpack.c.b16 %v719, %v718
        %v810 = vpack.c.b16 %v721, %v720
        %v811 = vpack.c.b16 %v723, %v722
        %v812 = vpack.c.b16 %v725, %v724
        %v813 = vpack.c.b16 %v727, %v726
        %v814 = vpack.c.b16 %v729, %v728
        %v815 = vpack.c.b16 %v731, %v730
        %v816 = vpack.c.b16 %v733, %v732
        %v817 = vpack.c.b16 %v735, %v734
        %v818 = vpack.c.b16 %v737, %v736
        %v819 = vpack.c.b16 %v739, %v738
        %v820 = vpack.c.b16 %v741, %v740
        %v821 = vpack.c.b16 %v743, %v742
        %v822 = vpack.c.b16 %v745, %v744
        %v823 = vpack.c.b16 %v747, %v746
        %v824 = vpack.c.b16 %v749, %v748
        %v825 = vpack.c.b16 %v751, %v750
        %v826 = vpack.c.b16 %v753, %v752
        %v827 = vpack.c.b16 %v755, %v754
        %v828 = vpack.c.b16 %v757, %v756
        %v829 = vpack.c.b16 %v759, %v758
        %v830 = vpack.c.b16 %v761, %v760
        %v831 = vpack.c.b16 %v763, %v762
        %v832 = vpack.c.b16 %v765, %v764
        %v833 = vpack.c.b16 %v767, %v766
        %v834 = vpack.c.b16 %v769, %v768
        %v835 = vpack.c.b16 %v771, %v770
        %v836 = vpack.c.b16 %v773, %v772
        %v837 = vpack.c.b16 %v775, %v774
        %v838 = vpack.c.b16 %v777, %v776
        %v839 = vpack.c.b16 %v779, %v778
        %v840 = vpack.c.b16 %v781, %v780
        %v841 = vpack.c.b16 %v783, %v782
        %v842 = vpack.c.b16 %v785, %v784
        %v843 = vpack.c.b16 %v787, %v786
        %v844 = vpack.c.b16 %v789, %v788
        %v845 = vpack.c.b16 %v791, %v790
        %v846 = vpack.c.b16 %v793, %v792
        %v847 = vpack.c.b16 %v795, %v794
        %v848 = vpack.c.b16 %v797, %v796
        %v849 = vpack.c.b16 %v799, %v798
        %v850 = vpack.c.b16 %v801, %v800
        %vm900 = vcmask 130048
        %v902 = vsel %vm900, %v458, 0
        %v905 = vsel %vm900, %v465, 0
        %v908 = vsel %vm900, %v472, 0
        %v911 = vsel %vm900, %v479, 0
        %v914 = vsel %vm900, %v486, 0
        %v917 = vsel %vm900, %v493, 0
        %v920 = vsel %vm900, %v500, 0
        %922 = vmatprep.subr.bf16.mxu0 0
        %923 = vmatpush1.bf16.msra.mxu0 %v802
        %924 = vmatprep.subr.bf16.mxu0 0
        %925 = vmatpush1.bf16.msra.mxu0 %v803
        %926 = vmatprep.subr.bf16.mxu0 0
        %927 = vmatpush1.bf16.msra.mxu0 %v804
        %928 = vmatprep.subr.bf16.mxu0 0
        %929 = vmatpush1.bf16.msra.mxu0 %v805
        %930 = vmatprep.subr.bf16.mxu0 0
        %931 = vmatpush1.bf16.msra.mxu0 %v806
        %932 = vmatprep.subr.bf16.mxu0 0
        %933 = vmatpush1.bf16.msra.mxu0 %v807
        %934 = vmatprep.subr.bf16.mxu0 0
        %935 = vmatpush1.bf16.msra.mxu0 %v808
        %936 = vmatprep.subr.bf16.mxu0 0
        %937 = vmatpush1.bf16.msra.mxu0 %v809
        %938 = vmatprep.subr.bf16.mxu0 0
        %939 = vmatpush1.bf16.msra.mxu0 %v810
        %940 = vmatprep.subr.bf16.mxu0 0
        %941 = vmatpush1.bf16.msra.mxu0 %v811
        %942 = vmatprep.subr.bf16.mxu0 0
        %943 = vmatpush1.bf16.msra.mxu0 %v812
        %944 = vmatprep.subr.bf16.mxu0 0
        %945 = vmatpush1.bf16.msra.mxu0 %v813
        %946 = vmatprep.subr.bf16.mxu0 0
        %947 = vmatpush1.bf16.msra.mxu0 %v814
        %948 = vmatprep.subr.bf16.mxu0 0
        %949 = vmatpush1.bf16.msra.mxu0 %v815
        %950 = vmatprep.subr.bf16.mxu0 0
        %951 = vmatpush1.bf16.msra.mxu0 %v816
        %952 = vmatprep.subr.bf16.mxu0 0
        %953 = vmatpush1.bf16.msra.mxu0 %v817
        %954 = vmatprep.mubr.bf16.mxu0 %v453
        %955 = vmatmul.mubr.bf16.gmra.mrb[0].mxu0 %v452
        %v956 = vpop.f32.mrb[0].mxu0
        %v957 = vadd.f32 %v604, %v956
        %v958 = vpop.f32.mrb[0].mxu0
        %v959 = vpop.f32.mrb[0].mxu0
        %v960 = vadd.f32 %v604, %v959
        %v961 = vpop.f32.mrb[0].mxu0
        %962 = vmatprep.mubr.bf16.mxu0 %v460
        %963 = vmatmul.mubr.bf16.gmra.mrb[0].mxu0 %v459
        %v964 = vpop.f32.mrb[0].mxu0
        %v965 = vadd.f32 %v604, %v964
        %v966 = vpop.f32.mrb[0].mxu0
        %v967 = vpop.f32.mrb[0].mxu0
        %v968 = vadd.f32 %v604, %v967
        %v969 = vpop.f32.mrb[0].mxu0
        %970 = vmatprep.mubr.bf16.mxu0 %v467
        %971 = vmatmul.mubr.bf16.gmra.mrb[0].mxu0 %v466
        %v972 = vpop.f32.mrb[0].mxu0
        %v973 = vadd.f32 %v604, %v972
        %v974 = vpop.f32.mrb[0].mxu0
        %v975 = vpop.f32.mrb[0].mxu0
        %v976 = vadd.f32 %v604, %v975
        %v977 = vpop.f32.mrb[0].mxu0
        %978 = vmatprep.mubr.bf16.mxu0 %v474
        %979 = vmatmul.mubr.bf16.gmra.mrb[0].mxu0 %v473
        %v980 = vpop.f32.mrb[0].mxu0
        %v981 = vadd.f32 %v604, %v980
        %v982 = vpop.f32.mrb[0].mxu0
        %v983 = vpop.f32.mrb[0].mxu0
        %v984 = vadd.f32 %v604, %v983
        %v985 = vpop.f32.mrb[0].mxu0
        %986 = vmatprep.mubr.bf16.mxu0 %v481
        %987 = vmatmul.mubr.bf16.gmra.mrb[0].mxu0 %v480
        %v988 = vpop.f32.mrb[0].mxu0
        %v989 = vadd.f32 %v604, %v988
        %v990 = vpop.f32.mrb[0].mxu0
        %v991 = vpop.f32.mrb[0].mxu0
        %v992 = vadd.f32 %v604, %v991
        %v993 = vpop.f32.mrb[0].mxu0
        %994 = vmatprep.mubr.bf16.mxu0 %v488
        %995 = vmatmul.mubr.bf16.gmra.mrb[0].mxu0 %v487
        %v996 = vpop.f32.mrb[0].mxu0
        %v997 = vadd.f32 %v604, %v996
        %v998 = vpop.f32.mrb[0].mxu0
        %v999 = vpop.f32.mrb[0].mxu0
        %v1000 = vadd.f32 %v604, %v999
        %v1001 = vpop.f32.mrb[0].mxu0
        %1002 = vmatprep.mubr.bf16.mxu0 %v495
        %1003 = vmatmul.mubr.bf16.gmra.mrb[0].mxu0 %v494
        %v1004 = vpop.f32.mrb[0].mxu0
        %v1005 = vadd.f32 %v604, %v1004
        %v1006 = vpop.f32.mrb[0].mxu0
        %v1007 = vpop.f32.mrb[0].mxu0
        %v1008 = vpop.f32.mrb[0].mxu0
        %1009 = vdwg.mxu0
        %1010 = vmatprep.subr.bf16.mxu0 0
        %1011 = vmatpush1.bf16.msra.mxu0 %v818
        %1012 = vmatprep.subr.bf16.mxu0 0
        %1013 = vmatpush1.bf16.msra.mxu0 %v819
        %1014 = vmatprep.subr.bf16.mxu0 0
        %1015 = vmatpush1.bf16.msra.mxu0 %v820
        %1016 = vmatprep.subr.bf16.mxu0 0
        %1017 = vmatpush1.bf16.msra.mxu0 %v821
        %1018 = vmatprep.subr.bf16.mxu0 0
        %1019 = vmatpush1.bf16.msra.mxu0 %v822
        %1020 = vmatprep.subr.bf16.mxu0 0
        %1021 = vmatpush1.bf16.msra.mxu0 %v823
        %1022 = vmatprep.subr.bf16.mxu0 0
        %1023 = vmatpush1.bf16.msra.mxu0 %v824
        %1024 = vmatprep.subr.bf16.mxu0 0
        %1025 = vmatpush1.bf16.msra.mxu0 %v825
        %1026 = vmatprep.subr.bf16.mxu0 0
        %1027 = vmatpush1.bf16.msra.mxu0 %v826
        %1028 = vmatprep.subr.bf16.mxu0 0
        %1029 = vmatpush1.bf16.msra.mxu0 %v827
        %1030 = vmatprep.subr.bf16.mxu0 0
        %1031 = vmatpush1.bf16.msra.mxu0 %v828
        %1032 = vmatprep.subr.bf16.mxu0 0
        %1033 = vmatpush1.bf16.msra.mxu0 %v829
        %1034 = vmatprep.subr.bf16.mxu0 0
        %1035 = vmatpush1.bf16.msra.mxu0 %v830
        %1036 = vmatprep.subr.bf16.mxu0 0
        %1037 = vmatpush1.bf16.msra.mxu0 %v831
        %1038 = vmatprep.subr.bf16.mxu0 0
        %1039 = vmatpush1.bf16.msra.mxu0 %v832
        %1040 = vmatprep.subr.bf16.mxu0 0
        %1041 = vmatpush1.bf16.msra.mxu0 %v833
        %1042 = vmatprep.mubr.bf16.mxu0 %v455
        %1043 = vmatmul.mubr.bf16.gmra.mrb[0].mxu0 %v454
        %v1044 = vpop.f32.mrb[0].mxu0
        %v1045 = vadd.f32 %v957, %v1044
        %v1046 = vpop.f32.mrb[0].mxu0
        %v1047 = vpop.f32.mrb[0].mxu0
        %v1048 = vadd.f32 %v960, %v1047
        %v1049 = vpop.f32.mrb[0].mxu0
        %1050 = vmatprep.mubr.bf16.mxu0 %v462
        %1051 = vmatmul.mubr.bf16.gmra.mrb[0].mxu0 %v461
        %v1052 = vpop.f32.mrb[0].mxu0
        %v1053 = vadd.f32 %v965, %v1052
        %v1054 = vpop.f32.mrb[0].mxu0
        %v1055 = vpop.f32.mrb[0].mxu0
        %v1056 = vadd.f32 %v968, %v1055
        %v1057 = vpop.f32.mrb[0].mxu0
        %1058 = vmatprep.mubr.bf16.mxu0 %v469
        %1059 = vmatmul.mubr.bf16.gmra.mrb[0].mxu0 %v468
        %v1060 = vpop.f32.mrb[0].mxu0
        %v1061 = vadd.f32 %v973, %v1060
        %v1062 = vpop.f32.mrb[0].mxu0
        %v1063 = vpop.f32.mrb[0].mxu0
        %v1064 = vadd.f32 %v976, %v1063
        %v1065 = vpop.f32.mrb[0].mxu0
        %1066 = vmatprep.mubr.bf16.mxu0 %v476
        %1067 = vmatmul.mubr.bf16.gmra.mrb[0].mxu0 %v475
        %v1068 = vpop.f32.mrb[0].mxu0
        %v1069 = vadd.f32 %v981, %v1068
        %v1070 = vpop.f32.mrb[0].mxu0
        %v1071 = vpop.f32.mrb[0].mxu0
        %v1072 = vadd.f32 %v984, %v1071
        %v1073 = vpop.f32.mrb[0].mxu0
        %1074 = vmatprep.mubr.bf16.mxu0 %v483
        %1075 = vmatmul.mubr.bf16.gmra.mrb[0].mxu0 %v482
        %v1076 = vpop.f32.mrb[0].mxu0
        %v1077 = vadd.f32 %v989, %v1076
        %v1078 = vpop.f32.mrb[0].mxu0
        %v1079 = vpop.f32.mrb[0].mxu0
        %v1080 = vadd.f32 %v992, %v1079
        %v1081 = vpop.f32.mrb[0].mxu0
        %1082 = vmatprep.mubr.bf16.mxu0 %v490
        %1083 = vmatmul.mubr.bf16.gmra.mrb[0].mxu0 %v489
        %v1084 = vpop.f32.mrb[0].mxu0
        %v1085 = vadd.f32 %v997, %v1084
        %v1086 = vpop.f32.mrb[0].mxu0
        %v1087 = vpop.f32.mrb[0].mxu0
        %v1088 = vadd.f32 %v1000, %v1087
        %v1089 = vpop.f32.mrb[0].mxu0
        %1090 = vmatprep.mubr.bf16.mxu0 %v497
        %1091 = vmatmul.mubr.bf16.gmra.mrb[0].mxu0 %v496
        %v1092 = vpop.f32.mrb[0].mxu0
        %v1093 = vadd.f32 %v1005, %v1092
        %v1094 = vpop.f32.mrb[0].mxu0
        %v1095 = vpop.f32.mrb[0].mxu0
        %v1096 = vpop.f32.mrb[0].mxu0
        %1097 = vdwg.mxu0
        %1098 = vmatprep.subr.bf16.mxu0 0
        %1099 = vmatpush1.bf16.msra.mxu0 %v834
        %1100 = vmatprep.subr.bf16.mxu0 0
        %1101 = vmatpush1.bf16.msra.mxu0 %v835
        %1102 = vmatprep.subr.bf16.mxu0 0
        %1103 = vmatpush1.bf16.msra.mxu0 %v836
        %1104 = vmatprep.subr.bf16.mxu0 0
        %1105 = vmatpush1.bf16.msra.mxu0 %v837
        %1106 = vmatprep.subr.bf16.mxu0 0
        %1107 = vmatpush1.bf16.msra.mxu0 %v838
        %1108 = vmatprep.subr.bf16.mxu0 0
        %1109 = vmatpush1.bf16.msra.mxu0 %v839
        %1110 = vmatprep.subr.bf16.mxu0 0
        %1111 = vmatpush1.bf16.msra.mxu0 %v840
        %1112 = vmatprep.subr.bf16.mxu0 0
        %1113 = vmatpush1.bf16.msra.mxu0 %v841
        %1114 = vmatprep.subr.bf16.mxu0 0
        %1115 = vmatpush1.bf16.msra.mxu0 %v842
        %1116 = vmatprep.subr.bf16.mxu0 0
        %1117 = vmatpush1.bf16.msra.mxu0 %v843
        %1118 = vmatprep.subr.bf16.mxu0 0
        %1119 = vmatpush1.bf16.msra.mxu0 %v844
        %1120 = vmatprep.subr.bf16.mxu0 0
        %1121 = vmatpush1.bf16.msra.mxu0 %v845
        %1122 = vmatprep.subr.bf16.mxu0 0
        %1123 = vmatpush1.bf16.msra.mxu0 %v846
        %1124 = vmatprep.subr.bf16.mxu0 0
        %1125 = vmatpush1.bf16.msra.mxu0 %v847
        %1126 = vmatprep.subr.bf16.mxu0 0
        %1127 = vmatpush1.bf16.msra.mxu0 %v848
        %1128 = vmatprep.subr.bf16.mxu0 0
        %1129 = vmatpush1.bf16.msra.mxu0 %v849
        %1130 = vmatprep.mubr.bf16.mxu0 %v457
        %1131 = vmatmul.mubr.bf16.gmra.mrb[0].mxu0 %v456
        %v1132 = vpop.f32.mrb[0].mxu0
        %v1133 = vadd.f32 %v1045, %v1132
        %v1134 = vpop.f32.mrb[0].mxu0
        %v1135 = vpop.f32.mrb[0].mxu0
        %v1136 = vadd.f32 %v1048, %v1135
        %v1137 = vpop.f32.mrb[0].mxu0
        %1138 = vmatprep.mubr.bf16.mxu0 %v464
        %1139 = vmatmul.mubr.bf16.gmra.mrb[0].mxu0 %v463
        %v1140 = vpop.f32.mrb[0].mxu0
        %v1141 = vadd.f32 %v1053, %v1140
        %v1142 = vpop.f32.mrb[0].mxu0
        %v1143 = vpop.f32.mrb[0].mxu0
        %v1144 = vadd.f32 %v1056, %v1143
        %v1145 = vpop.f32.mrb[0].mxu0
        %1146 = vmatprep.mubr.bf16.mxu0 %v471
        %1147 = vmatmul.mubr.bf16.gmra.mrb[0].mxu0 %v470
        %v1148 = vpop.f32.mrb[0].mxu0
        %v1149 = vadd.f32 %v1061, %v1148
        %v1150 = vpop.f32.mrb[0].mxu0
        %v1151 = vpop.f32.mrb[0].mxu0
        %v1152 = vadd.f32 %v1064, %v1151
        %v1153 = vpop.f32.mrb[0].mxu0
        %1154 = vmatprep.mubr.bf16.mxu0 %v478
        %1155 = vmatmul.mubr.bf16.gmra.mrb[0].mxu0 %v477
        %v1156 = vpop.f32.mrb[0].mxu0
        %v1157 = vadd.f32 %v1069, %v1156
        %v1158 = vpop.f32.mrb[0].mxu0
        %v1159 = vpop.f32.mrb[0].mxu0
        %v1160 = vadd.f32 %v1072, %v1159
        %v1161 = vpop.f32.mrb[0].mxu0
        %1162 = vmatprep.mubr.bf16.mxu0 %v485
        %1163 = vmatmul.mubr.bf16.gmra.mrb[0].mxu0 %v484
        %v1164 = vpop.f32.mrb[0].mxu0
        %v1165 = vadd.f32 %v1077, %v1164
        %v1166 = vpop.f32.mrb[0].mxu0
        %v1167 = vpop.f32.mrb[0].mxu0
        %v1168 = vadd.f32 %v1080, %v1167
        %v1169 = vpop.f32.mrb[0].mxu0
        %1170 = vmatprep.mubr.bf16.mxu0 %v492
        %1171 = vmatmul.mubr.bf16.gmra.mrb[0].mxu0 %v491
        %v1172 = vpop.f32.mrb[0].mxu0
        %v1173 = vadd.f32 %v1085, %v1172
        %v1174 = vpop.f32.mrb[0].mxu0
        %v1175 = vpop.f32.mrb[0].mxu0
        %v1176 = vadd.f32 %v1088, %v1175
        %v1177 = vpop.f32.mrb[0].mxu0
        %1178 = vmatprep.mubr.bf16.mxu0 %v499
        %1179 = vmatmul.mubr.bf16.gmra.mrb[0].mxu0 %v498
        %v1180 = vpop.f32.mrb[0].mxu0
        %v1181 = vadd.f32 %v1093, %v1180
        %v1182 = vpop.f32.mrb[0].mxu0
        %v1183 = vpop.f32.mrb[0].mxu0
        %v1184 = vpop.f32.mrb[0].mxu0
        %1185 = vdwg.mxu0
        %1186 = vmatprep.subr.bf16.mxu0 0
        %1187 = vmatpush1.bf16.msra.mxu0 %v850
        %1188 = vmatprep.subr.bf16.mxu0 0
        %1189 = vmatpush1.bf16.msra.mxu0 0
        %1190 = vmatprep.subr.bf16.mxu0 0
        %1191 = vmatpush1.bf16.msra.mxu0 0
        %1192 = vmatprep.subr.bf16.mxu0 0
        %1193 = vmatpush1.bf16.msra.mxu0 0
        %1194 = vmatprep.subr.bf16.mxu0 0
        %1195 = vmatpush1.bf16.msra.mxu0 0
        %1196 = vmatprep.subr.bf16.mxu0 0
        %1197 = vmatpush1.bf16.msra.mxu0 0
        %1198 = vmatprep.subr.bf16.mxu0 0
        %1199 = vmatpush1.bf16.msra.mxu0 0
        %1200 = vmatprep.subr.bf16.mxu0 0
        %1201 = vmatpush1.bf16.msra.mxu0 0
        %1202 = vmatprep.subr.bf16.mxu0 0
        %1203 = vmatpush1.bf16.msra.mxu0 0
        %1204 = vmatprep.subr.bf16.mxu0 0
        %1205 = vmatpush1.bf16.msra.mxu0 0
        %1206 = vmatprep.subr.bf16.mxu0 0
        %1207 = vmatpush1.bf16.msra.mxu0 0
        %1208 = vmatprep.subr.bf16.mxu0 0
        %1209 = vmatpush1.bf16.msra.mxu0 0
        %1210 = vmatprep.subr.bf16.mxu0 0
        %1211 = vmatpush1.bf16.msra.mxu0 0
        %1212 = vmatprep.subr.bf16.mxu0 0
        %1213 = vmatpush1.bf16.msra.mxu0 0
        %1214 = vmatprep.subr.bf16.mxu0 0
        %1215 = vmatpush1.bf16.msra.mxu0 0
        %1216 = vmatprep.subr.bf16.mxu0 0
        %1217 = vmatpush1.bf16.msra.mxu0 0
        %1218 = vmatprep.mubr.bf16.mxu0 0
        %1219 = vmatmul.mubr.bf16.gmra.mrb[0].mxu0 %v902
        %v1220 = vpop.f32.mrb[0].mxu0
        %v1221 = vadd.f32 %v1133, %v1220
        %v1222 = vpop.f32.mrb[0].mxu0
        %v1223 = vpop.f32.mrb[0].mxu0
        %v1224 = vadd.f32 %v1136, %v1223
        %v1225 = vpop.f32.mrb[0].mxu0
        %1226 = vmatprep.mubr.bf16.mxu0 0
        %1227 = vmatmul.mubr.bf16.gmra.mrb[0].mxu0 %v905
        %v1228 = vpop.f32.mrb[0].mxu0
        %v1229 = vadd.f32 %v1141, %v1228
        %v1230 = vpop.f32.mrb[0].mxu0
        %v1231 = vpop.f32.mrb[0].mxu0
        %v1232 = vadd.f32 %v1144, %v1231
        %v1233 = vpop.f32.mrb[0].mxu0
        %1234 = vmatprep.mubr.bf16.mxu0 0
        %1235 = vmatmul.mubr.bf16.gmra.mrb[0].mxu0 %v908
        %v1236 = vpop.f32.mrb[0].mxu0
        %v1237 = vadd.f32 %v1149, %v1236
        %v1238 = vpop.f32.mrb[0].mxu0
        %v1239 = vpop.f32.mrb[0].mxu0
        %v1240 = vadd.f32 %v1152, %v1239
        %v1241 = vpop.f32.mrb[0].mxu0
        %1242 = vmatprep.mubr.bf16.mxu0 0
        %1243 = vmatmul.mubr.bf16.gmra.mrb[0].mxu0 %v911
        %v1244 = vpop.f32.mrb[0].mxu0
        %v1245 = vadd.f32 %v1157, %v1244
        %v1246 = vpop.f32.mrb[0].mxu0
        %v1247 = vpop.f32.mrb[0].mxu0
        %v1248 = vadd.f32 %v1160, %v1247
        %v1249 = vpop.f32.mrb[0].mxu0
        %1250 = vmatprep.mubr.bf16.mxu0 0
        %1251 = vmatmul.mubr.bf16.gmra.mrb[0].mxu0 %v914
        %v1252 = vpop.f32.mrb[0].mxu0
        %v1253 = vadd.f32 %v1165, %v1252
        %v1254 = vpop.f32.mrb[0].mxu0
        %v1255 = vpop.f32.mrb[0].mxu0
        %v1256 = vadd.f32 %v1168, %v1255
        %v1257 = vpop.f32.mrb[0].mxu0
        %1258 = vmatprep.mubr.bf16.mxu0 0
        %1259 = vmatmul.mubr.bf16.gmra.mrb[0].mxu0 %v917
        %v1260 = vpop.f32.mrb[0].mxu0
        %v1261 = vadd.f32 %v1173, %v1260
        %v1262 = vpop.f32.mrb[0].mxu0
        %v1263 = vpop.f32.mrb[0].mxu0
        %v1264 = vadd.f32 %v1176, %v1263
        %v1265 = vpop.f32.mrb[0].mxu0
        %1266 = vmatprep.mubr.bf16.mxu0 0
        %1267 = vmatmul.mubr.bf16.gmra.mrb[0].mxu0 %v920
        %v1268 = vpop.f32.mrb[0].mxu0
        %v1269 = vadd.f32 %v1181, %v1268
        %v1270 = vpop.f32.mrb[0].mxu0
        %v1271 = vpop.f32.mrb[0].mxu0
        %v1272 = vpop.f32.mrb[0].mxu0
        %1273 = vdwg.mxu0
        %v1274 = vmax.f32 %v1221, 0.0
        %v1275 = vmax.f32 %v1224, 0.0
        %v1276 = vmax.f32 %v1229, 0.0
        %v1277 = vmax.f32 %v1232, 0.0
        %v1278 = vmax.f32 %v1237, 0.0
        %v1279 = vmax.f32 %v1240, 0.0
        %v1280 = vmax.f32 %v1245, 0.0
        %v1281 = vmax.f32 %v1248, 0.0
        %v1282 = vmax.f32 %v1253, 0.0
        %v1283 = vmax.f32 %v1256, 0.0
        %v1284 = vmax.f32 %v1261, 0.0
        %v1285 = vmax.f32 %v1264, 0.0
        %v1286 = vmax.f32 %v1269, 0.0
        %v1287 = vpack.c.bf16 %v1275, %v1274
        %v1288 = vpack.c.bf16 %v1277, %v1276
        %v1289 = vpack.c.bf16 %v1279, %v1278
        %v1290 = vpack.c.bf16 %v1281, %v1280
        %v1291 = vpack.c.bf16 %v1283, %v1282
        %v1292 = vpack.c.bf16 %v1285, %v1284
        %v1293 = vpack.c.bf16 %v1286, %v1286
        %v1294 = vld [vmem:[#allocation7] sm:$0xf]
        %v1295 = vld [vmem:[#allocation7 + $0x4] sm:$0xf]
        %v1296 = vld [vmem:[#allocation7 + $0x8] sm:$0xf]
        %v1297 = vld [vmem:[#allocation7 + $0xc] sm:$0xf]
        %v1298 = vld [vmem:[#allocation7 + $0x10] sm:$0xf]
        %v1299 = vld [vmem:[#allocation7 + $0x14] sm:$0xf]
        %v1300 = vld [vmem:[#allocation7 + $0x18] sm:$0xf]
        %v1301 = vld [vmem:[#allocation7 + $0x1c] sm:$0xf]
        %v1302 = vld [vmem:[#allocation7 + $0x20] sm:$0xf]
        %v1303 = vld [vmem:[#allocation7 + $0x24] sm:$0xf]
        %v1304 = vld [vmem:[#allocation7 + $0x28] sm:$0xf]
        %v1305 = vld [vmem:[#allocation7 + $0x2c] sm:$0xf]
        %v1306 = vld [vmem:[#allocation7 + $0x30] sm:$0xf]
        %v1307 = vld [vmem:[#allocation7 + $0x34] sm:$0xf]
        %v1308 = vld [vmem:[#allocation7 + $0x38] sm:$0xf]
        %v1309 = vld [vmem:[#allocation7 + $0x3c] sm:$0xf]
        %v1310 = vld [vmem:[%s4] sm:$0x1]
        %v1312 = vlaneseq
        %v1313 = vshrl.u32 %v1312, 7
        %v1314 = vsub.s32 0, %v1313
        %v1315 = vrot.slane %v1310, %v1314
        %v1333 = vunpack.c.l.b16 %v1294
        %v1334 = vunpack.c.l.b16 %v1295
        %v1335 = vunpack.c.l.b16 %v1296
        %v1336 = vunpack.c.l.b16 %v1297
        %v1337 = vunpack.c.l.b16 %v1298
        %v1338 = vunpack.c.l.b16 %v1299
        %v1339 = vunpack.c.l.b16 %v1300
        %v1340 = vunpack.c.l.b16 %v1301
        %v1341 = vunpack.c.l.b16 %v1302
        %v1342 = vunpack.c.l.b16 %v1303
        %v1343 = vunpack.c.l.b16 %v1304
        %v1344 = vunpack.c.l.b16 %v1305
        %v1345 = vunpack.c.l.b16 %v1306
        %v1346 = vunpack.c.l.b16 %v1307
        %v1347 = vunpack.c.l.b16 %v1308
        %v1348 = vunpack.c.l.b16 %v1309
        %v1349 = vpack.c.b16 %v1334, %v1333
        %v1350 = vpack.c.b16 %v1336, %v1335
        %v1351 = vpack.c.b16 %v1338, %v1337
        %v1352 = vpack.c.b16 %v1340, %v1339
        %v1353 = vpack.c.b16 %v1342, %v1341
        %v1354 = vpack.c.b16 %v1344, %v1343
        %v1355 = vpack.c.b16 %v1346, %v1345
        %v1356 = vpack.c.b16 %v1348, %v1347
        %1365 = vmatprep.subr.bf16.mxu0 0
        %1366 = vmatpush1.bf16.msra.mxu0 %v1349
        %1367 = vmatprep.subr.bf16.mxu0 0
        %1368 = vmatpush1.bf16.msra.mxu0 %v1350
        %1369 = vmatprep.subr.bf16.mxu0 0
        %1370 = vmatpush1.bf16.msra.mxu0 %v1351
        %1371 = vmatprep.subr.bf16.mxu0 0
        %1372 = vmatpush1.bf16.msra.mxu0 %v1352
        %1373 = vmatprep.subr.bf16.mxu0 0
        %1374 = vmatpush1.bf16.msra.mxu0 %v1353
        %1375 = vmatprep.subr.bf16.mxu0 0
        %1376 = vmatpush1.bf16.msra.mxu0 %v1354
        %1377 = vmatprep.subr.bf16.mxu0 0
        %1378 = vmatpush1.bf16.msra.mxu0 %v1355
        %1379 = vmatprep.subr.bf16.mxu0 0
        %1380 = vmatpush1.bf16.msra.mxu0 %v1356
        %1381 = vmatprep.subr.bf16.mxu0 0
        %1382 = vmatpush1.bf16.msra.mxu0 0
        %1383 = vmatprep.subr.bf16.mxu0 0
        %1384 = vmatpush1.bf16.msra.mxu0 0
        %1385 = vmatprep.subr.bf16.mxu0 0
        %1386 = vmatpush1.bf16.msra.mxu0 0
        %1387 = vmatprep.subr.bf16.mxu0 0
        %1388 = vmatpush1.bf16.msra.mxu0 0
        %1389 = vmatprep.subr.bf16.mxu0 0
        %1390 = vmatpush1.bf16.msra.mxu0 0
        %1391 = vmatprep.subr.bf16.mxu0 0
        %1392 = vmatpush1.bf16.msra.mxu0 0
        %1393 = vmatprep.subr.bf16.mxu0 0
        %1394 = vmatpush1.bf16.msra.mxu0 0
        %1395 = vmatprep.subr.bf16.mxu0 0
        %1396 = vmatpush1.bf16.msra.mxu0 0
        %1397 = vmatprep.mubr.bf16.mxu0 0
        %1398 = vmatmul.mubr.bf16.gmra.mrb[0].mxu0 %v1287
        %v1399 = vpop.f32.mrb[0].mxu0
        %v1400 = vadd.f32 %v1315, %v1399
        %v1401 = vpop.f32.mrb[0].mxu0
        %v1402 = vpop.f32.mrb[0].mxu0
        %v1403 = vadd.f32 %v1315, %v1402
        %v1404 = vpop.f32.mrb[0].mxu0
        %1405 = vmatprep.mubr.bf16.mxu0 0
        %1406 = vmatmul.mubr.bf16.gmra.mrb[0].mxu0 %v1288
        %v1407 = vpop.f32.mrb[0].mxu0
        %v1408 = vadd.f32 %v1315, %v1407
        %v1409 = vpop.f32.mrb[0].mxu0
        %v1410 = vpop.f32.mrb[0].mxu0
        %v1411 = vadd.f32 %v1315, %v1410
        %v1412 = vpop.f32.mrb[0].mxu0
        %1413 = vmatprep.mubr.bf16.mxu0 0
        %1414 = vmatmul.mubr.bf16.gmra.mrb[0].mxu0 %v1289
        %v1415 = vpop.f32.mrb[0].mxu0
        %v1416 = vadd.f32 %v1315, %v1415
        %v1417 = vpop.f32.mrb[0].mxu0
        %v1418 = vpop.f32.mrb[0].mxu0
        %v1419 = vadd.f32 %v1315, %v1418
        %v1420 = vpop.f32.mrb[0].mxu0
        %1421 = vmatprep.mubr.bf16.mxu0 0
        %1422 = vmatmul.mubr.bf16.gmra.mrb[0].mxu0 %v1290
        %v1423 = vpop.f32.mrb[0].mxu0
        %v1424 = vadd.f32 %v1315, %v1423
        %v1425 = vpop.f32.mrb[0].mxu0
        %v1426 = vpop.f32.mrb[0].mxu0
        %v1427 = vadd.f32 %v1315, %v1426
        %v1428 = vpop.f32.mrb[0].mxu0
        %1429 = vmatprep.mubr.bf16.mxu0 0
        %1430 = vmatmul.mubr.bf16.gmra.mrb[0].mxu0 %v1291
        %v1431 = vpop.f32.mrb[0].mxu0
        %v1432 = vadd.f32 %v1315, %v1431
        %v1433 = vpop.f32.mrb[0].mxu0
        %v1434 = vpop.f32.mrb[0].mxu0
        %v1435 = vadd.f32 %v1315, %v1434
        %v1436 = vpop.f32.mrb[0].mxu0
        %1437 = vmatprep.mubr.bf16.mxu0 0
        %1438 = vmatmul.mubr.bf16.gmra.mrb[0].mxu0 %v1292
        %v1439 = vpop.f32.mrb[0].mxu0
        %v1440 = vadd.f32 %v1315, %v1439
        %v1441 = vpop.f32.mrb[0].mxu0
        %v1442 = vpop.f32.mrb[0].mxu0
        %v1443 = vadd.f32 %v1315, %v1442
        %v1444 = vpop.f32.mrb[0].mxu0
        %1445 = vmatprep.mubr.bf16.mxu0 0
        %1446 = vmatmul.mubr.bf16.gmra.mrb[0].mxu0 %v1293
        %v1447 = vpop.f32.mrb[0].mxu0
        %v1448 = vadd.f32 %v1315, %v1447
        %v1449 = vpop.f32.mrb[0].mxu0
        %v1450 = vpop.f32.mrb[0].mxu0
        %v1451 = vpop.f32.mrb[0].mxu0
        %1452 = vdwg.mxu0
        %v1453 = vmax.f32 %v1400, 0.0
        %v1454 = vmax.f32 %v1403, 0.0
        %v1455 = vmax.f32 %v1408, 0.0
        %v1456 = vmax.f32 %v1411, 0.0
        %v1457 = vmax.f32 %v1416, 0.0
        %v1458 = vmax.f32 %v1419, 0.0
        %v1459 = vmax.f32 %v1424, 0.0
        %v1460 = vmax.f32 %v1427, 0.0
        %v1461 = vmax.f32 %v1432, 0.0
        %v1462 = vmax.f32 %v1435, 0.0
        %v1463 = vmax.f32 %v1440, 0.0
        %v1464 = vmax.f32 %v1443, 0.0
        %v1465 = vmax.f32 %v1448, 0.0
        %v1466 = vpack.c.bf16 %v1454, %v1453
        %v1467 = vpack.c.bf16 %v1456, %v1455
        %v1468 = vpack.c.bf16 %v1458, %v1457
        %v1469 = vpack.c.bf16 %v1460, %v1459
        %v1470 = vpack.c.bf16 %v1462, %v1461
        %v1471 = vpack.c.bf16 %v1464, %v1463
        %v1472 = vpack.c.bf16 %v1465, %v1465
        %v1473 = vld [vmem:[#allocation8] sm:$0xf]
        %v1474 = vld [vmem:[#allocation8 + $0x4] sm:$0xf]
        %v1475 = vld [vmem:[#allocation8 + $0x8] sm:$0xf]
        %v1476 = vld [vmem:[#allocation8 + $0xc] sm:$0xf]
        %v1477 = vld [vmem:[#allocation8 + $0x10] sm:$0xf]
        %v1478 = vld [vmem:[#allocation8 + $0x14] sm:$0xf]
        %v1479 = vld [vmem:[#allocation8 + $0x18] sm:$0xf]
        %v1480 = vld [vmem:[#allocation8 + $0x1c] sm:$0xf]
        %v1481 = vld [vmem:[#allocation8 + $0x20] sm:$0xf]
        %v1482 = vld [vmem:[#allocation8 + $0x24] sm:$0xf]
        %v1483 = vld [vmem:[#allocation8 + $0x28] sm:$0xf]
        %v1484 = vld [vmem:[#allocation8 + $0x2c] sm:$0xf]
        %v1485 = vld [vmem:[#allocation8 + $0x30] sm:$0xf]
        %v1486 = vld [vmem:[#allocation8 + $0x34] sm:$0xf]
        %v1487 = vld [vmem:[#allocation8 + $0x38] sm:$0xf]
        %v1488 = vld [vmem:[#allocation8 + $0x3c] sm:$0xf]
        %v1489 = vld [vmem:[%s6] sm:$0x1]
        %v1491 = vlaneseq
        %v1492 = vshrl.u32 %v1491, 7
        %v1493 = vsub.s32 0, %v1492
        %v1494 = vrot.slane %v1489, %v1493
        %v1512 = vunpack.c.l.b16 %v1473
        %v1513 = vunpack.c.l.b16 %v1474
        %v1514 = vunpack.c.l.b16 %v1475
        %v1515 = vunpack.c.l.b16 %v1476
        %v1516 = vunpack.c.l.b16 %v1477
        %v1517 = vunpack.c.l.b16 %v1478
        %v1518 = vunpack.c.l.b16 %v1479
        %v1519 = vunpack.c.l.b16 %v1480
        %v1520 = vunpack.c.l.b16 %v1481
        %v1521 = vunpack.c.l.b16 %v1482
        %v1522 = vunpack.c.l.b16 %v1483
        %v1523 = vunpack.c.l.b16 %v1484
        %v1524 = vunpack.c.l.b16 %v1485
        %v1525 = vunpack.c.l.b16 %v1486
        %v1526 = vunpack.c.l.b16 %v1487
        %v1527 = vunpack.c.l.b16 %v1488
        %v1528 = vpack.c.b16 %v1513, %v1512
        %v1529 = vpack.c.b16 %v1515, %v1514
        %v1530 = vpack.c.b16 %v1517, %v1516
        %v1531 = vpack.c.b16 %v1519, %v1518
        %v1532 = vpack.c.b16 %v1521, %v1520
        %v1533 = vpack.c.b16 %v1523, %v1522
        %v1534 = vpack.c.b16 %v1525, %v1524
        %v1535 = vpack.c.b16 %v1527, %v1526
        %1544 = vmatprep.subr.bf16.mxu0 0
        %1545 = vmatpush1.bf16.msra.mxu0 %v1528
        %1546 = vmatprep.subr.bf16.mxu0 0
        %1547 = vmatpush1.bf16.msra.mxu0 %v1529
        %1548 = vmatprep.subr.bf16.mxu0 0
        %1549 = vmatpush1.bf16.msra.mxu0 %v1530
        %1550 = vmatprep.subr.bf16.mxu0 0
        %1551 = vmatpush1.bf16.msra.mxu0 %v1531
        %1552 = vmatprep.subr.bf16.mxu0 0
        %1553 = vmatpush1.bf16.msra.mxu0 %v1532
        %1554 = vmatprep.subr.bf16.mxu0 0
        %1555 = vmatpush1.bf16.msra.mxu0 %v1533
        %1556 = vmatprep.subr.bf16.mxu0 0
        %1557 = vmatpush1.bf16.msra.mxu0 %v1534
        %1558 = vmatprep.subr.bf16.mxu0 0
        %1559 = vmatpush1.bf16.msra.mxu0 %v1535
        %1560 = vmatprep.subr.bf16.mxu0 0
        %1561 = vmatpush1.bf16.msra.mxu0 0
        %1562 = vmatprep.subr.bf16.mxu0 0
        %1563 = vmatpush1.bf16.msra.mxu0 0
        %1564 = vmatprep.subr.bf16.mxu0 0
        %1565 = vmatpush1.bf16.msra.mxu0 0
        %1566 = vmatprep.subr.bf16.mxu0 0
        %1567 = vmatpush1.bf16.msra.mxu0 0
        %1568 = vmatprep.subr.bf16.mxu0 0
        %1569 = vmatpush1.bf16.msra.mxu0 0
        %1570 = vmatprep.subr.bf16.mxu0 0
        %1571 = vmatpush1.bf16.msra.mxu0 0
        %1572 = vmatprep.subr.bf16.mxu0 0
        %1573 = vmatpush1.bf16.msra.mxu0 0
        %1574 = vmatprep.subr.bf16.mxu0 0
        %1575 = vmatpush1.bf16.msra.mxu0 0
        %1576 = vmatprep.mubr.bf16.mxu0 0
        %1577 = vmatmul.mubr.bf16.gmra.mrb[0].mxu0 %v1466
        %v1578 = vpop.f32.mrb[0].mxu0
        %v1579 = vadd.f32 %v1494, %v1578
        %v1580 = vpop.f32.mrb[0].mxu0
        %v1581 = vpop.f32.mrb[0].mxu0
        %v1582 = vadd.f32 %v1494, %v1581
        %v1583 = vpop.f32.mrb[0].mxu0
        %1584 = vmatprep.mubr.bf16.mxu0 0
        %1585 = vmatmul.mubr.bf16.gmra.mrb[0].mxu0 %v1467
        %v1586 = vpop.f32.mrb[0].mxu0
        %v1587 = vadd.f32 %v1494, %v1586
        %v1588 = vpop.f32.mrb[0].mxu0
        %v1589 = vpop.f32.mrb[0].mxu0
        %v1590 = vadd.f32 %v1494, %v1589
        %v1591 = vpop.f32.mrb[0].mxu0
        %1592 = vmatprep.mubr.bf16.mxu0 0
        %1593 = vmatmul.mubr.bf16.gmra.mrb[0].mxu0 %v1468
        %v1594 = vpop.f32.mrb[0].mxu0
        %v1595 = vadd.f32 %v1494, %v1594
        %v1596 = vpop.f32.mrb[0].mxu0
        %v1597 = vpop.f32.mrb[0].mxu0
        %v1598 = vadd.f32 %v1494, %v1597
        %v1599 = vpop.f32.mrb[0].mxu0
        %1600 = vmatprep.mubr.bf16.mxu0 0
        %1601 = vmatmul.mubr.bf16.gmra.mrb[0].mxu0 %v1469
        %v1602 = vpop.f32.mrb[0].mxu0
        %v1603 = vadd.f32 %v1494, %v1602
        %v1604 = vpop.f32.mrb[0].mxu0
        %v1605 = vpop.f32.mrb[0].mxu0
        %v1606 = vadd.f32 %v1494, %v1605
        %v1607 = vpop.f32.mrb[0].mxu0
        %1608 = vmatprep.mubr.bf16.mxu0 0
        %1609 = vmatmul.mubr.bf16.gmra.mrb[0].mxu0 %v1470
        %v1610 = vpop.f32.mrb[0].mxu0
        %v1611 = vadd.f32 %v1494, %v1610
        %v1612 = vpop.f32.mrb[0].mxu0
        %v1613 = vpop.f32.mrb[0].mxu0
        %v1614 = vadd.f32 %v1494, %v1613
        %v1615 = vpop.f32.mrb[0].mxu0
        %1616 = vmatprep.mubr.bf16.mxu0 0
        %1617 = vmatmul.mubr.bf16.gmra.mrb[0].mxu0 %v1471
        %v1618 = vpop.f32.mrb[0].mxu0
        %v1619 = vadd.f32 %v1494, %v1618
        %v1620 = vpop.f32.mrb[0].mxu0
        %v1621 = vpop.f32.mrb[0].mxu0
        %v1622 = vadd.f32 %v1494, %v1621
        %v1623 = vpop.f32.mrb[0].mxu0
        %1624 = vmatprep.mubr.bf16.mxu0 0
        %1625 = vmatmul.mubr.bf16.gmra.mrb[0].mxu0 %v1472
        %v1626 = vpop.f32.mrb[0].mxu0
        %v1627 = vadd.f32 %v1494, %v1626
        %v1628 = vpop.f32.mrb[0].mxu0
        %v1629 = vpop.f32.mrb[0].mxu0
        %v1630 = vpop.f32.mrb[0].mxu0
        %1631 = vdwg.mxu0
        %1632 = vst [vmem:[%s348] sm:$0xff] %v1579
        %1633 = vst [vmem:[%s348 + $0x8] sm:$0xff] %v1582
        %1634 = vst [vmem:[%s348 + $0x10] sm:$0xff] %v1587
        %1635 = vst [vmem:[%s348 + $0x18] sm:$0xff] %v1590
        %1636 = vst [vmem:[%s348 + $0x20] sm:$0xff] %v1595
        %1637 = vst [vmem:[%s348 + $0x28] sm:$0xff] %v1598
        %1638 = vst [vmem:[%s348 + $0x30] sm:$0xff] %v1603
        %1639 = vst [vmem:[%s348 + $0x38] sm:$0xff] %v1606
        %1640 = vst [vmem:[%s348 + $0x40] sm:$0xff] %v1611
        %1641 = vst [vmem:[%s348 + $0x48] sm:$0xff] %v1614
        %1642 = vst [vmem:[%s348 + $0x50] sm:$0xff] %v1619
        %1643 = vst [vmem:[%s348 + $0x58] sm:$0xff] %v1622
        %1644 = vst [vmem:[%s348 + $0x60] sm:$0xff] %v1627
        %s1645 = sand.u32 %s186, 1
        %s1646 = scalar_lea.sflag [#allocation4], %s1645
        %s1647 = sand.u32 %s186, 1
        %s1648 = smul.addr %s1647, 104
        %s1649 = scalar_lea.vmem [#allocation10], %s1648
        // Predicated region
        $region65: #{tpu_custom_call.1} parent=47 // pred_check
          %p1650 = pneg %p196
        $region66: #{tpu_custom_call.1} parent=47 // pred_check_branch
          %1652 = sbr.rel (%p1650) target = $region68
        $region67: #{tpu_custom_call.1} parent=47 // pred_region
          %s1653 = smul.u32 13, %s26
          %s1654 = ssub.s32 25, %s1653
          %p1655 = scmp.lt.s32.totalorder %s1654, 13
          %s1656 = scalar_select %p1655, %s1654, 13
          %s1657 = smul.u32 128, %s1656
          %s1659 = ssub.s32 1664, %s1657
          %1660 = vsyncadd %s1646, %s1659
          %p1661 = scmp.ne.s32.totalorder 0, %s1657
          %s1662 = smul.addr %s1653, 128
          %s1663 = scalar_lea.hbm %s7, %s1662
          %s1664 = smul.u32 8, %s1656
          %s1665 = sshll.u32 %s1649, 4
          %s1666 = int_to_ptr.vmem [resolvable:$true] %s1665
          %s1667 = sshll.u32 %s1664, 4
          %1671 = dma.vmem_to_hbm [thread:$0]  (%p1661), %s1666, %s1667, %s1663, %s1646, 128, 128, 8
        $region68: #{tpu_custom_call.1} parent=47 // pred_fallthru
          _
      $region48: #{tpu_custom_call.1} parent=5 // pred_fallthru
        _
      %p1672 = scmp.le.s32.totalorder 2, %s21
      // Predicated region
      $region69: #{tpu_custom_call.1} parent=5 // pred_check
        %p1673 = pneg %p1672
      $region70: #{tpu_custom_call.1} parent=5 // pred_check_branch
        %1675 = sbr.rel (%p1673) target = $region72
      $region71: #{tpu_custom_call.1} parent=5 // pred_region
        %s1676 = ssub.s32 %s21, 2
        // Predicated region
        $region73: #{tpu_custom_call.1} parent=71 // pred_check
          %p1677 = pneg %p202
        $region74: #{tpu_custom_call.1} parent=71 // pred_check_branch
          %1679 = sbr.rel (%p1677) target = $region76
        $region75: #{tpu_custom_call.1} parent=71 // pred_region
          %s1680 = sand.u32 %s187, 1
          %s1681 = scalar_lea.sflag [#allocation4], %s1680
          %s1682 = sand.u32 %s187, 1
          %s1683 = smul.addr %s1682, 104
          %s1684 = scalar_lea.vmem [#allocation10], %s1683
          %1685 = dma.done %s1681, 1664
        $region76: #{tpu_custom_call.1} parent=71 // pred_fallthru
          _
      $region72: #{tpu_custom_call.1} parent=5 // pred_fallthru
        _
    $region6: #{tpu_custom_call.1} parent=1 // loop_footer
      %s25 = sadd.s32 1, %s21
    $region7: #{tpu_custom_call.1} parent=1 // loop_footer_branch
      %20 = sbr.rel target = $region3
    $region8: #{tpu_custom_call.1} parent=1 // loop_exit
      _
    %1686 = vsyncpa [#allocation3], 1
    %s1687 = scalar_lea.sflag [#allocation3], 1
    %1688 = vsyncpa %s1687, 1
    %1689 = vsyncpa [#allocation6], 1
    %1690 = vsyncpa [#allocation9], 1
    %1691 = vsyncpa [#allocation4], 1
    %s1692 = scalar_lea.sflag [#allocation4], 1
    %1693 = vsyncpa %s1692, 1

</llo_original>
